<compile_context>
chip_gen: v7x
topology: tpu7x:2x2x1
jax: 0.10.0
libtpu: 0.0.40
codegen_flags: <defaults>
</compile_context>

<pallas_src>
import functools

import jax
import jax.numpy as jnp
from jax import lax
from jax.experimental import pallas as pl
from jax.experimental.pallas import tpu as pltpu

INPUT = 300
HIDDEN = 100
NCLASS = 2

IP = 384           # INPUT padded to a multiple of 128 lanes
HP = 128           # HIDDEN padded to a full lane width
GATES = 4 * HP     # fused i|f|g|o gate dim (512)
NOUT_PAD = 128     # classifier output padded to a full lane width
NEG = -1e30        # "minus infinity" bias for padded classifier lanes


def _round_up(x, m):
    return (x + m - 1) // m * m


def _sigmoid(x):
    # sigmoid(x) == 0.5*(tanh(x/2)+1): a single EUP tanh instead of exp + recip/div.
    return 0.5 * (jnp.tanh(0.5 * x) + 1.0)


def _topic_lstm_kernel(x_ref, wih_ref, b_ref, whh_ref, wout_ref, bout_ref,
                       out_ref, h_scr, c_scr, xp_scr,
                       *, t_chunk, seq, need_mask, unroll):
    """One (batch_tile, seq_chunk) grid step.

    x_ref   : (t_chunk, b_tile, IP)  bf16 raw input chunk (time-major, padded)
    wih_ref : (IP, GATES)   bf16 fused input weights (gate order i,f,g,o)
    b_ref   : (1, GATES)    f32  fused bias (b_ih + b_hh)
    whh_ref : (HP, GATES)   bf16 fused recurrent weights
    wout_ref: (HP, NOUT_PAD) bf16 padded classifier weight
    bout_ref: (1, NOUT_PAD)  f32  padded classifier bias (pad lanes = -1e30)
    out_ref : (b_tile, NOUT_PAD) f32 log-softmax output (written on last chunk)
    h_scr/c_scr : (b_tile, HP) f32 recurrent state, persists across seq chunks
    xp_scr  : (t_chunk, b_tile, GATES) f32 per-chunk projected gates
    """
    t_axis = 1  # grid = (batch_tiles, seq_chunks); seq chunks iterate innermost

    @pl.when(pl.program_id(t_axis) == 0)
    def _init():
        h_scr[...] = jnp.zeros_like(h_scr)
        c_scr[...] = jnp.zeros_like(c_scr)

    b_tile = x_ref.shape[1]

    # Parallel (non-serial) work: project the whole chunk through Wih on the MXU
    # in one big matmul, then add the fused bias. This is the former hoisted XLA
    # matmul, now fused so the xp intermediate never touches HBM.
    x_flat = x_ref[...].reshape(t_chunk * b_tile, IP)
    xp = jnp.dot(x_flat, wih_ref[...], preferred_element_type=jnp.float32)
    xp_scr[...] = (xp + b_ref[...]).reshape(t_chunk, b_tile, GATES)

    whh = whh_ref[...]                       # resident bf16 recurrent weights
    if need_mask:
        chunk_start = pl.program_id(t_axis) * t_chunk

    def step(t, carry):
        h, c = carry
        # one fused (b_tile, 4H) matmul per timestep on the serial critical path
        gates = xp_scr[t] + jnp.dot(h.astype(whh.dtype), whh,
                                    preferred_element_type=jnp.float32)
        i_g = _sigmoid(gates[:, 0 * HP:1 * HP])
        f_g = _sigmoid(gates[:, 1 * HP:2 * HP])
        g_g = jnp.tanh(gates[:, 2 * HP:3 * HP])
        o_g = _sigmoid(gates[:, 3 * HP:4 * HP])
        c_new = f_g * c + i_g * g_g
        h_new = o_g * jnp.tanh(c_new)
        if need_mask:
            # Padded (beyond-seq) timesteps must not advance the state.
            valid = ((chunk_start + t) < seq).astype(jnp.float32)
            h_new = h + valid * (h_new - h)
            c_new = c + valid * (c_new - c)
        return h_new, c_new

    # h/c live in registers within the chunk; scratch is touched once per chunk.
    h_f, c_f = lax.fori_loop(0, t_chunk, step, (h_scr[...], c_scr[...]),
                             unroll=unroll)
    h_scr[...] = h_f
    c_scr[...] = c_f

    @pl.when(pl.program_id(t_axis) == pl.num_programs(t_axis) - 1)
    def _finalize():
        logits = jnp.dot(h_f.astype(wout_ref.dtype), wout_ref[...],
                         preferred_element_type=jnp.float32) + bout_ref[...]
        # LogSoftmax over the lane-dense last dim; padded lanes carry -1e30 bias
        # so exp() underflows to 0 and they do not perturb the result.
        m = jnp.max(logits, axis=-1, keepdims=True)
        shifted = logits - m
        lse = jnp.log(jnp.sum(jnp.exp(shifted), axis=-1, keepdims=True))
        out_ref[...] = shifted - lse


def _fuse_and_pad_params(params):
    """Per-gate params -> fused, tile-padded, MXU-friendly (bf16 weights) params."""
    wih, whh, b, wout, bout = (params["wih"], params["whh"], params["b"],
                               params["wout"], params["bout"])
    wih_f = jnp.concatenate(
        [jnp.pad(wih[g], ((0, IP - INPUT), (0, HP - HIDDEN))) for g in range(4)],
        axis=1).astype(jnp.bfloat16)
    whh_f = jnp.concatenate(
        [jnp.pad(whh[g], ((0, HP - HIDDEN), (0, HP - HIDDEN))) for g in range(4)],
        axis=1).astype(jnp.bfloat16)
    b_f = jnp.concatenate(
        [jnp.pad(b[g], ((0, 0), (0, HP - HIDDEN))) for g in range(4)],
        axis=1).astype(jnp.float32)
    wout_p = jnp.pad(wout, ((0, HP - HIDDEN),
                            (0, NOUT_PAD - NCLASS))).astype(jnp.bfloat16)
    bout_p = jnp.concatenate(
        [bout, jnp.full((1, NOUT_PAD - NCLASS), NEG, jnp.float32)],
        axis=1).astype(jnp.float32)
    return wih_f, whh_f, b_f, wout_p, bout_p


def topic_model_forward(x, params, *, seq_chunk_target=32):
    """x: (batch, seq, 300) float32 (batch_first, like the PyTorch module).
    Returns log-probabilities of shape (1, batch, 2)."""
    batch, seq, _ = x.shape
    wih_f, whh_f, b_f, wout_p, bout_p = _fuse_and_pad_params(params)

    # Batch padding / tiling (>=8 sublanes; 128-wide tiles for big batches).
    # TODO(synk): on v7x use pltpu.CORE_PARALLEL with b_tile = b_pad//2 so batch
    # tiles shard across the two TensorCores; kept "parallel" here for portability.
    if batch <= 128:
        b_pad = _round_up(batch, 8)
        b_tile = b_pad
    else:
        b_pad = _round_up(batch, 128)
        b_tile = 128

    # Seq chunking: pick the number of chunks from the target, then the smallest
    # chunk that covers seq (minimal padding even for prime seq). Padded timesteps
    # are masked inside the kernel so they never advance h/c.
    n_chunks = max(1, -(-seq // seq_chunk_target))
    t_chunk = -(-seq // n_chunks)
    seq_pad = n_chunks * t_chunk
    need_mask = seq_pad != seq

    # Moderate unroll: keeps scheduler visibility without blowing the 64-vreg file
    # (gates at b_tile=128 is 64 f32 vregs per step).
    unroll = 8 if b_tile <= 16 else (4 if b_tile <= 32 else 2)
    unroll = max(1, min(unroll, t_chunk))

    # Time-major, padded, bf16 input stream (transpose+pad+cast fuse into one pass).
    x_tm = jnp.transpose(x, (1, 0, 2))
    x_tm = jnp.pad(x_tm, ((0, seq_pad - seq), (0, b_pad - batch), (0, IP - INPUT)))
    x_tm = x_tm.astype(jnp.bfloat16)

    grid = (b_pad // b_tile, seq_pad // t_chunk)

    flops = (2 * seq_pad * b_pad * IP * GATES      # fused input projection
             + 2 * seq_pad * b_pad * HP * GATES    # recurrent matmuls
             + 10 * seq_pad * b_pad * HP           # gate elementwise
             + 2 * b_pad * HP * NOUT_PAD)          # classifier head
    transcendentals = 5 * seq_pad * b_pad * HP
    bytes_accessed = (2 * seq_pad * b_pad * IP                       # x (bf16)
                      + 2 * (IP * GATES + HP * GATES + HP * NOUT_PAD)  # bf16 weights
                      + 4 * (GATES + NOUT_PAD + b_pad * NOUT_PAD))     # biases + out

    kernel = functools.partial(_topic_lstm_kernel, t_chunk=t_chunk, seq=seq,
                               need_mask=need_mask, unroll=unroll)

    out = pl.pallas_call(
        kernel,
        out_shape=jax.ShapeDtypeStruct((b_pad, NOUT_PAD), jnp.float32),
        grid_spec=pltpu.PrefetchScalarGridSpec(
            num_scalar_prefetch=0,
            grid=grid,
            in_specs=[
                pl.BlockSpec((t_chunk, b_tile, IP), lambda bi, ti: (ti, bi, 0)),
                pl.BlockSpec((IP, GATES), lambda bi, ti: (0, 0)),
                pl.BlockSpec((1, GATES), lambda bi, ti: (0, 0)),
                pl.BlockSpec((HP, GATES), lambda bi, ti: (0, 0)),
                pl.BlockSpec((HP, NOUT_PAD), lambda bi, ti: (0, 0)),
                pl.BlockSpec((1, NOUT_PAD), lambda bi, ti: (0, 0)),
            ],
            out_specs=pl.BlockSpec((b_tile, NOUT_PAD), lambda bi, ti: (bi, 0)),
            scratch_shapes=[
                pltpu.VMEM((b_tile, HP), jnp.float32),                 # h
                pltpu.VMEM((b_tile, HP), jnp.float32),                 # c
                pltpu.VMEM((t_chunk, b_tile, GATES), jnp.float32),     # projected xp
            ],
        ),
        compiler_params=pltpu.CompilerParams(
            dimension_semantics=("parallel", "arbitrary"),
            # Worst-case working set (t_chunk=32, b_tile=128, bf16 x stream) is
            # ~16 MiB, comfortably double-buffered within 32 MiB on every generation
            # including v7x (64 MiB physical).
            vmem_limit_bytes=32 * 1024 * 1024,
        ),
        cost_estimate=pl.CostEstimate(flops=flops,
                                      transcendentals=transcendentals,
                                      bytes_accessed=bytes_accessed),
    )(x_tm, wih_f, b_f, whh_f, wout_p, bout_p)

    # TODO(synk): hold Whh in MXU weight staging across the chunk
    # (pltpu.matmul_push_rhs / matmul_acc_lhs / matmul_pop) for the small-batch
    # latency-bound regime; skipped here for portability across v5e/v6e/v7x.
    return out[:batch, :NCLASS][None, :, :]     # (1, batch, 2), like PyTorch


def init_params(key):
    """Deterministic synthetic parameters with PyTorch LSTM/Linear init ranges.
    Stored per-gate (i,f,g,o), transposed for right-multiplication."""
    ks = jax.random.split(key, 6)
    bound = 1.0 / jnp.sqrt(HIDDEN)
    wih = jax.random.uniform(ks[0], (4, INPUT, HIDDEN), jnp.float32, -bound, bound)
    whh = jax.random.uniform(ks[1], (4, HIDDEN, HIDDEN), jnp.float32, -bound, bound)
    b_ih = jax.random.uniform(ks[2], (4, 1, HIDDEN), jnp.float32, -bound, bound)
    b_hh = jax.random.uniform(ks[3], (4, 1, HIDDEN), jnp.float32, -bound, bound)
    wout = jax.random.uniform(ks[4], (HIDDEN, NCLASS), jnp.float32, -bound, bound)
    bout = jax.random.uniform(ks[5], (1, NCLASS), jnp.float32, -bound, bound)
    return {"wih": wih, "whh": whh, "b": b_ih + b_hh, "wout": wout, "bout": bout}


def reference_forward(x, params):
    """Pure-JAX f32 reference of the same math (correctness check)."""
    wih, whh, b, wout, bout = (params["wih"], params["whh"], params["b"],
                               params["wout"], params["bout"])
    batch = x.shape[0]
    h = jnp.zeros((batch, HIDDEN), jnp.float32)
    c = jnp.zeros((batch, HIDDEN), jnp.float32)

    def step(carry, x_t):
        h, c = carry
        def gate(g):
            return x_t @ wih[g] + h @ whh[g] + b[g]
        i_g = jax.nn.sigmoid(gate(0))
        f_g = jax.nn.sigmoid(gate(1))
        g_g = jnp.tanh(gate(2))
        o_g = jax.nn.sigmoid(gate(3))
        c_new = f_g * c + i_g * g_g
        h_new = o_g * jnp.tanh(c_new)
        return (h_new, c_new), None

    (h, c), _ = lax.scan(step, (h, c), jnp.transpose(x, (1, 0, 2)))
    logits = h @ wout + bout
    return jax.nn.log_softmax(logits, axis=-1)[None, :, :]


if __name__ == "__main__":
    key = jax.random.PRNGKey(0)
    k_x, k_p = jax.random.split(key)

    batch, seq = 2, 8
    x = jax.random.normal(k_x, (batch, seq, INPUT), jnp.float32)
    params = init_params(k_p)

    fwd = jax.jit(functools.partial(topic_model_forward, seq_chunk_target=32))
    out = jax.block_until_ready(fwd(x, params))
    ref = jax.block_until_ready(reference_forward(x, params))

    assert out.shape == (1, batch, NCLASS)
    assert bool(jnp.all(jnp.isfinite(out))), "non-finite output"
    # bf16 MXU inputs through the recurrence -> slightly looser tolerance than f32.
    assert jnp.allclose(out, ref, rtol=2e-2, atol=2e-2), "mismatch vs JAX reference"

    print("KERNEL_OK")
</pallas_src>

<mosaic_0001>
module attributes {stable_mosaic.version = 11 : i64} {
  func.func @_topic_lstm_kernel(%arg0: i32, %arg1: i32, %arg2: memref<8x8x384xbf16, #tpu.memory_space<vmem>>, %arg3: memref<384x512xbf16, #tpu.memory_space<vmem>>, %arg4: memref<1x512xf32, #tpu.memory_space<vmem>>, %arg5: memref<128x512xbf16, #tpu.memory_space<vmem>>, %arg6: memref<128x128xbf16, #tpu.memory_space<vmem>>, %arg7: memref<1x128xf32, #tpu.memory_space<vmem>>, %arg8: memref<8x128xf32, #tpu.memory_space<vmem>>, %arg9: memref<8x128xf32, #tpu.memory_space<vmem>>, %arg10: memref<8x128xf32, #tpu.memory_space<vmem>>, %arg11: memref<8x8x512xf32, #tpu.memory_space<vmem>>) attributes {dimension_semantics = [#tpu.dimension_semantics<parallel>, #tpu.dimension_semantics<arbitrary>], iteration_bounds = array<i64: 1, 1>, scalar_prefetch = 0 : i64, scratch_operands = 3 : i64, tpu.core_type = #tpu.core_type<tc>, window_params = [{transform_indices = @transform_0, window_bounds = array<i64: 8, 8, 384>}, {pipeline_mode = #tpu.pipeline_mode<synchronous>, transform_indices = @transform_1, window_bounds = array<i64: 384, 512>}, {pipeline_mode = #tpu.pipeline_mode<synchronous>, transform_indices = @transform_2, window_bounds = array<i64: 1, 512>}, {pipeline_mode = #tpu.pipeline_mode<synchronous>, transform_indices = @transform_3, window_bounds = array<i64: 128, 512>}, {pipeline_mode = #tpu.pipeline_mode<synchronous>, transform_indices = @transform_4, window_bounds = array<i64: 128, 128>}, {pipeline_mode = #tpu.pipeline_mode<synchronous>, transform_indices = @transform_5, window_bounds = array<i64: 1, 128>}, {transform_indices = @transform_6, window_bounds = array<i64: 8, 128>}]} {
    %c0_i32 = arith.constant 0 : i32
    %0 = arith.cmpi eq, %arg1, %c0_i32 : i32
    %1 = arith.extui %0 : i1 to i32
    %c0_i32_0 = arith.constant 0 : i32
    %2 = arith.cmpi ne, %1, %c0_i32_0 : i32
    scf.if %2 {
      %cst_119 = arith.constant 0.000000e+00 : f32
      %316 = vector.broadcast %cst_119 : f32 to vector<8x128xf32>
      %c0_120 = arith.constant 0 : index
      %c0_121 = arith.constant 0 : index
      %317 = vector.load %arg9[%c0_120, %c0_121] : memref<8x128xf32, #tpu.memory_space<vmem>>, vector<8x128xf32>
      tpu.vector_store %arg9[%c0_120, %c0_121], %316 {strides = array<i32>} : memref<8x128xf32, #tpu.memory_space<vmem>>, vector<8x128xf32>,
      %cst_122 = arith.constant 0.000000e+00 : f32
      %318 = vector.broadcast %cst_122 : f32 to vector<8x128xf32>
      %c0_123 = arith.constant 0 : index
      %c0_124 = arith.constant 0 : index
      %319 = vector.load %arg10[%c0_123, %c0_124] : memref<8x128xf32, #tpu.memory_space<vmem>>, vector<8x128xf32>
      tpu.vector_store %arg10[%c0_123, %c0_124], %318 {strides = array<i32>} : memref<8x128xf32, #tpu.memory_space<vmem>>, vector<8x128xf32>,
    } else {
    }
    %c0 = arith.constant 0 : index
    %c0_1 = arith.constant 0 : index
    %c0_2 = arith.constant 0 : index
    %3 = vector.load %arg2[%c0, %c0_1, %c0_2] : memref<8x8x384xbf16, #tpu.memory_space<vmem>>, vector<8x8x384xbf16>
    %4 = vector.shape_cast %3 : vector<8x8x384xbf16> to vector<64x384xbf16>
    %c0_3 = arith.constant 0 : index
    %c0_4 = arith.constant 0 : index
    %5 = vector.load %arg3[%c0_3, %c0_4] : memref<384x512xbf16, #tpu.memory_space<vmem>>, vector<384x512xbf16>
    %cst = arith.constant dense<0.000000e+00> : vector<64x512xf32>
    %6 = tpu.matmul %4, %5, %cst {dimension_numbers = #tpu.dot_dimension_numbers<[1], [0], [0], [1], [0, 0, 1, 1], [], []>} : vector<64x384xbf16>, vector<384x512xbf16>, vector<64x512xf32> -> vector<64x512xf32>
    %c0_5 = arith.constant 0 : index
    %c0_6 = arith.constant 0 : index
    %7 = vector.load %arg4[%c0_5, %c0_6] : memref<1x512xf32, #tpu.memory_space<vmem>>, vector<1x512xf32>
    %8 = vector.broadcast %7 : vector<1x512xf32> to vector<64x512xf32>
    %9 = arith.addf %6, %8 : vector<64x512xf32>
    %10 = vector.shape_cast %9 : vector<64x512xf32> to vector<8x8x512xf32>
    %c0_7 = arith.constant 0 : index
    %c0_8 = arith.constant 0 : index
    %c0_9 = arith.constant 0 : index
    %11 = vector.load %arg11[%c0_7, %c0_8, %c0_9] : memref<8x8x512xf32, #tpu.memory_space<vmem>>, vector<8x8x512xf32>
    tpu.vector_store %arg11[%c0_7, %c0_8, %c0_9], %10 {strides = array<i32>} : memref<8x8x512xf32, #tpu.memory_space<vmem>>, vector<8x8x512xf32>,
    %c0_10 = arith.constant 0 : index
    %c0_11 = arith.constant 0 : index
    %12 = vector.load %arg5[%c0_10, %c0_11] : memref<128x512xbf16, #tpu.memory_space<vmem>>, vector<128x512xbf16>
    %c0_12 = arith.constant 0 : index
    %c0_13 = arith.constant 0 : index
    %13 = vector.load %arg9[%c0_12, %c0_13] : memref<8x128xf32, #tpu.memory_space<vmem>>, vector<8x128xf32>
    %c0_14 = arith.constant 0 : index
    %c0_15 = arith.constant 0 : index
    %14 = vector.load %arg10[%c0_14, %c0_15] : memref<8x128xf32, #tpu.memory_space<vmem>>, vector<8x128xf32>
    %c0_i32_16 = arith.constant 0 : i32
    %15 = arith.index_cast %c0_i32_16 : i32 to index
    %c0_17 = arith.constant 0 : index
    %c0_18 = arith.constant 0 : index
    %16 = vector.load %arg11[%15, %c0_17, %c0_18] : memref<8x8x512xf32, #tpu.memory_space<vmem>>, vector<1x8x512xf32>
    %17 = vector.shape_cast %16 : vector<1x8x512xf32> to vector<8x512xf32>
    %18 = arith.truncf %13 : vector<8x128xf32> to vector<8x128xbf16>
    %cst_19 = arith.constant dense<0.000000e+00> : vector<8x512xf32>
    %19 = tpu.matmul %18, %12, %cst_19 {dimension_numbers = #tpu.dot_dimension_numbers<[1], [0], [0], [1], [0, 0, 1, 1], [], []>} : vector<8x128xbf16>, vector<128x512xbf16>, vector<8x512xf32> -> vector<8x512xf32>
    %20 = arith.addf %17, %19 : vector<8x512xf32>
    %21 = vector.extract_strided_slice %20 {offsets = [0, 0], sizes = [8, 128], strides = [1, 1]} : vector<8x512xf32> to vector<8x128xf32>
    %cst_20 = arith.constant 5.000000e-01 : f32
    %22 = vector.broadcast %cst_20 : f32 to vector<8x128xf32>
    %23 = arith.mulf %22, %21 : vector<8x128xf32>
    %24 = math.tanh %23 : vector<8x128xf32>
    %cst_21 = arith.constant 1.000000e+00 : f32
    %25 = vector.broadcast %cst_21 : f32 to vector<8x128xf32>
    %26 = arith.addf %24, %25 : vector<8x128xf32>
    %cst_22 = arith.constant 5.000000e-01 : f32
    %27 = vector.broadcast %cst_22 : f32 to vector<8x128xf32>
    %28 = arith.mulf %27, %26 : vector<8x128xf32>
    %29 = vector.extract_strided_slice %20 {offsets = [0, 128], sizes = [8, 128], strides = [1, 1]} : vector<8x512xf32> to vector<8x128xf32>
    %cst_23 = arith.constant 5.000000e-01 : f32
    %30 = vector.broadcast %cst_23 : f32 to vector<8x128xf32>
    %31 = arith.mulf %30, %29 : vector<8x128xf32>
    %32 = math.tanh %31 : vector<8x128xf32>
    %cst_24 = arith.constant 1.000000e+00 : f32
    %33 = vector.broadcast %cst_24 : f32 to vector<8x128xf32>
    %34 = arith.addf %32, %33 : vector<8x128xf32>
    %cst_25 = arith.constant 5.000000e-01 : f32
    %35 = vector.broadcast %cst_25 : f32 to vector<8x128xf32>
    %36 = arith.mulf %35, %34 : vector<8x128xf32>
    %37 = vector.extract_strided_slice %20 {offsets = [0, 256], sizes = [8, 128], strides = [1, 1]} : vector<8x512xf32> to vector<8x128xf32>
    %38 = math.tanh %37 : vector<8x128xf32>
    %39 = vector.extract_strided_slice %20 {offsets = [0, 384], sizes = [8, 128], strides = [1, 1]} : vector<8x512xf32> to vector<8x128xf32>
    %cst_26 = arith.constant 5.000000e-01 : f32
    %40 = vector.broadcast %cst_26 : f32 to vector<8x128xf32>
    %41 = arith.mulf %40, %39 : vector<8x128xf32>
    %42 = math.tanh %41 : vector<8x128xf32>
    %cst_27 = arith.constant 1.000000e+00 : f32
    %43 = vector.broadcast %cst_27 : f32 to vector<8x128xf32>
    %44 = arith.addf %42, %43 : vector<8x128xf32>
    %cst_28 = arith.constant 5.000000e-01 : f32
    %45 = vector.broadcast %cst_28 : f32 to vector<8x128xf32>
    %46 = arith.mulf %45, %44 : vector<8x128xf32>
    %47 = arith.mulf %36, %14 : vector<8x128xf32>
    %48 = arith.mulf %28, %38 : vector<8x128xf32>
    %49 = arith.addf %47, %48 : vector<8x128xf32>
    %50 = math.tanh %49 : vector<8x128xf32>
    %51 = arith.mulf %46, %50 : vector<8x128xf32>
    %c1_i32 = arith.constant 1 : i32
    %52 = arith.index_cast %c1_i32 : i32 to index
    %c0_29 = arith.constant 0 : index
    %c0_30 = arith.constant 0 : index
    %53 = vector.load %arg11[%52, %c0_29, %c0_30] : memref<8x8x512xf32, #tpu.memory_space<vmem>>, vector<1x8x512xf32>
    %54 = vector.shape_cast %53 : vector<1x8x512xf32> to vector<8x512xf32>
    %55 = arith.truncf %51 : vector<8x128xf32> to vector<8x128xbf16>
    %cst_31 = arith.constant dense<0.000000e+00> : vector<8x512xf32>
    %56 = tpu.matmul %55, %12, %cst_31 {dimension_numbers = #tpu.dot_dimension_numbers<[1], [0], [0], [1], [0, 0, 1, 1], [], []>} : vector<8x128xbf16>, vector<128x512xbf16>, vector<8x512xf32> -> vector<8x512xf32>
    %57 = arith.addf %54, %56 : vector<8x512xf32>
    %58 = vector.extract_strided_slice %57 {offsets = [0, 0], sizes = [8, 128], strides = [1, 1]} : vector<8x512xf32> to vector<8x128xf32>
    %cst_32 = arith.constant 5.000000e-01 : f32
    %59 = vector.broadcast %cst_32 : f32 to vector<8x128xf32>
    %60 = arith.mulf %59, %58 : vector<8x128xf32>
    %61 = math.tanh %60 : vector<8x128xf32>
    %cst_33 = arith.constant 1.000000e+00 : f32
    %62 = vector.broadcast %cst_33 : f32 to vector<8x128xf32>
    %63 = arith.addf %61, %62 : vector<8x128xf32>
    %cst_34 = arith.constant 5.000000e-01 : f32
    %64 = vector.broadcast %cst_34 : f32 to vector<8x128xf32>
    %65 = arith.mulf %64, %63 : vector<8x128xf32>
    %66 = vector.extract_strided_slice %57 {offsets = [0, 128], sizes = [8, 128], strides = [1, 1]} : vector<8x512xf32> to vector<8x128xf32>
    %cst_35 = arith.constant 5.000000e-01 : f32
    %67 = vector.broadcast %cst_35 : f32 to vector<8x128xf32>
    %68 = arith.mulf %67, %66 : vector<8x128xf32>
    %69 = math.tanh %68 : vector<8x128xf32>
    %cst_36 = arith.constant 1.000000e+00 : f32
    %70 = vector.broadcast %cst_36 : f32 to vector<8x128xf32>
    %71 = arith.addf %69, %70 : vector<8x128xf32>
    %cst_37 = arith.constant 5.000000e-01 : f32
    %72 = vector.broadcast %cst_37 : f32 to vector<8x128xf32>
    %73 = arith.mulf %72, %71 : vector<8x128xf32>
    %74 = vector.extract_strided_slice %57 {offsets = [0, 256], sizes = [8, 128], strides = [1, 1]} : vector<8x512xf32> to vector<8x128xf32>
    %75 = math.tanh %74 : vector<8x128xf32>
    %76 = vector.extract_strided_slice %57 {offsets = [0, 384], sizes = [8, 128], strides = [1, 1]} : vector<8x512xf32> to vector<8x128xf32>
    %cst_38 = arith.constant 5.000000e-01 : f32
    %77 = vector.broadcast %cst_38 : f32 to vector<8x128xf32>
    %78 = arith.mulf %77, %76 : vector<8x128xf32>
    %79 = math.tanh %78 : vector<8x128xf32>
    %cst_39 = arith.constant 1.000000e+00 : f32
    %80 = vector.broadcast %cst_39 : f32 to vector<8x128xf32>
    %81 = arith.addf %79, %80 : vector<8x128xf32>
    %cst_40 = arith.constant 5.000000e-01 : f32
    %82 = vector.broadcast %cst_40 : f32 to vector<8x128xf32>
    %83 = arith.mulf %82, %81 : vector<8x128xf32>
    %84 = arith.mulf %73, %49 : vector<8x128xf32>
    %85 = arith.mulf %65, %75 : vector<8x128xf32>
    %86 = arith.addf %84, %85 : vector<8x128xf32>
    %87 = math.tanh %86 : vector<8x128xf32>
    %88 = arith.mulf %83, %87 : vector<8x128xf32>
    %c2_i32 = arith.constant 2 : i32
    %89 = arith.index_cast %c2_i32 : i32 to index
    %c0_41 = arith.constant 0 : index
    %c0_42 = arith.constant 0 : index
    %90 = vector.load %arg11[%89, %c0_41, %c0_42] : memref<8x8x512xf32, #tpu.memory_space<vmem>>, vector<1x8x512xf32>
    %91 = vector.shape_cast %90 : vector<1x8x512xf32> to vector<8x512xf32>
    %92 = arith.truncf %88 : vector<8x128xf32> to vector<8x128xbf16>
    %cst_43 = arith.constant dense<0.000000e+00> : vector<8x512xf32>
    %93 = tpu.matmul %92, %12, %cst_43 {dimension_numbers = #tpu.dot_dimension_numbers<[1], [0], [0], [1], [0, 0, 1, 1], [], []>} : vector<8x128xbf16>, vector<128x512xbf16>, vector<8x512xf32> -> vector<8x512xf32>
    %94 = arith.addf %91, %93 : vector<8x512xf32>
    %95 = vector.extract_strided_slice %94 {offsets = [0, 0], sizes = [8, 128], strides = [1, 1]} : vector<8x512xf32> to vector<8x128xf32>
    %cst_44 = arith.constant 5.000000e-01 : f32
    %96 = vector.broadcast %cst_44 : f32 to vector<8x128xf32>
    %97 = arith.mulf %96, %95 : vector<8x128xf32>
    %98 = math.tanh %97 : vector<8x128xf32>
    %cst_45 = arith.constant 1.000000e+00 : f32
    %99 = vector.broadcast %cst_45 : f32 to vector<8x128xf32>
    %100 = arith.addf %98, %99 : vector<8x128xf32>
    %cst_46 = arith.constant 5.000000e-01 : f32
    %101 = vector.broadcast %cst_46 : f32 to vector<8x128xf32>
    %102 = arith.mulf %101, %100 : vector<8x128xf32>
    %103 = vector.extract_strided_slice %94 {offsets = [0, 128], sizes = [8, 128], strides = [1, 1]} : vector<8x512xf32> to vector<8x128xf32>
    %cst_47 = arith.constant 5.000000e-01 : f32
    %104 = vector.broadcast %cst_47 : f32 to vector<8x128xf32>
    %105 = arith.mulf %104, %103 : vector<8x128xf32>
    %106 = math.tanh %105 : vector<8x128xf32>
    %cst_48 = arith.constant 1.000000e+00 : f32
    %107 = vector.broadcast %cst_48 : f32 to vector<8x128xf32>
    %108 = arith.addf %106, %107 : vector<8x128xf32>
    %cst_49 = arith.constant 5.000000e-01 : f32
    %109 = vector.broadcast %cst_49 : f32 to vector<8x128xf32>
    %110 = arith.mulf %109, %108 : vector<8x128xf32>
    %111 = vector.extract_strided_slice %94 {offsets = [0, 256], sizes = [8, 128], strides = [1, 1]} : vector<8x512xf32> to vector<8x128xf32>
    %112 = math.tanh %111 : vector<8x128xf32>
    %113 = vector.extract_strided_slice %94 {offsets = [0, 384], sizes = [8, 128], strides = [1, 1]} : vector<8x512xf32> to vector<8x128xf32>
    %cst_50 = arith.constant 5.000000e-01 : f32
    %114 = vector.broadcast %cst_50 : f32 to vector<8x128xf32>
    %115 = arith.mulf %114, %113 : vector<8x128xf32>
    %116 = math.tanh %115 : vector<8x128xf32>
    %cst_51 = arith.constant 1.000000e+00 : f32
    %117 = vector.broadcast %cst_51 : f32 to vector<8x128xf32>
    %118 = arith.addf %116, %117 : vector<8x128xf32>
    %cst_52 = arith.constant 5.000000e-01 : f32
    %119 = vector.broadcast %cst_52 : f32 to vector<8x128xf32>
    %120 = arith.mulf %119, %118 : vector<8x128xf32>
    %121 = arith.mulf %110, %86 : vector<8x128xf32>
    %122 = arith.mulf %102, %112 : vector<8x128xf32>
    %123 = arith.addf %121, %122 : vector<8x128xf32>
    %124 = math.tanh %123 : vector<8x128xf32>
    %125 = arith.mulf %120, %124 : vector<8x128xf32>
    %c3_i32 = arith.constant 3 : i32
    %126 = arith.index_cast %c3_i32 : i32 to index
    %c0_53 = arith.constant 0 : index
    %c0_54 = arith.constant 0 : index
    %127 = vector.load %arg11[%126, %c0_53, %c0_54] : memref<8x8x512xf32, #tpu.memory_space<vmem>>, vector<1x8x512xf32>
    %128 = vector.shape_cast %127 : vector<1x8x512xf32> to vector<8x512xf32>
    %129 = arith.truncf %125 : vector<8x128xf32> to vector<8x128xbf16>
    %cst_55 = arith.constant dense<0.000000e+00> : vector<8x512xf32>
    %130 = tpu.matmul %129, %12, %cst_55 {dimension_numbers = #tpu.dot_dimension_numbers<[1], [0], [0], [1], [0, 0, 1, 1], [], []>} : vector<8x128xbf16>, vector<128x512xbf16>, vector<8x512xf32> -> vector<8x512xf32>
    %131 = arith.addf %128, %130 : vector<8x512xf32>
    %132 = vector.extract_strided_slice %131 {offsets = [0, 0], sizes = [8, 128], strides = [1, 1]} : vector<8x512xf32> to vector<8x128xf32>
    %cst_56 = arith.constant 5.000000e-01 : f32
    %133 = vector.broadcast %cst_56 : f32 to vector<8x128xf32>
    %134 = arith.mulf %133, %132 : vector<8x128xf32>
    %135 = math.tanh %134 : vector<8x128xf32>
    %cst_57 = arith.constant 1.000000e+00 : f32
    %136 = vector.broadcast %cst_57 : f32 to vector<8x128xf32>
    %137 = arith.addf %135, %136 : vector<8x128xf32>
    %cst_58 = arith.constant 5.000000e-01 : f32
    %138 = vector.broadcast %cst_58 : f32 to vector<8x128xf32>
    %139 = arith.mulf %138, %137 : vector<8x128xf32>
    %140 = vector.extract_strided_slice %131 {offsets = [0, 128], sizes = [8, 128], strides = [1, 1]} : vector<8x512xf32> to vector<8x128xf32>
    %cst_59 = arith.constant 5.000000e-01 : f32
    %141 = vector.broadcast %cst_59 : f32 to vector<8x128xf32>
    %142 = arith.mulf %141, %140 : vector<8x128xf32>
    %143 = math.tanh %142 : vector<8x128xf32>
    %cst_60 = arith.constant 1.000000e+00 : f32
    %144 = vector.broadcast %cst_60 : f32 to vector<8x128xf32>
    %145 = arith.addf %143, %144 : vector<8x128xf32>
    %cst_61 = arith.constant 5.000000e-01 : f32
    %146 = vector.broadcast %cst_61 : f32 to vector<8x128xf32>
    %147 = arith.mulf %146, %145 : vector<8x128xf32>
    %148 = vector.extract_strided_slice %131 {offsets = [0, 256], sizes = [8, 128], strides = [1, 1]} : vector<8x512xf32> to vector<8x128xf32>
    %149 = math.tanh %148 : vector<8x128xf32>
    %150 = vector.extract_strided_slice %131 {offsets = [0, 384], sizes = [8, 128], strides = [1, 1]} : vector<8x512xf32> to vector<8x128xf32>
    %cst_62 = arith.constant 5.000000e-01 : f32
    %151 = vector.broadcast %cst_62 : f32 to vector<8x128xf32>
    %152 = arith.mulf %151, %150 : vector<8x128xf32>
    %153 = math.tanh %152 : vector<8x128xf32>
    %cst_63 = arith.constant 1.000000e+00 : f32
    %154 = vector.broadcast %cst_63 : f32 to vector<8x128xf32>
    %155 = arith.addf %153, %154 : vector<8x128xf32>
    %cst_64 = arith.constant 5.000000e-01 : f32
    %156 = vector.broadcast %cst_64 : f32 to vector<8x128xf32>
    %157 = arith.mulf %156, %155 : vector<8x128xf32>
    %158 = arith.mulf %147, %123 : vector<8x128xf32>
    %159 = arith.mulf %139, %149 : vector<8x128xf32>
    %160 = arith.addf %158, %159 : vector<8x128xf32>
    %161 = math.tanh %160 : vector<8x128xf32>
    %162 = arith.mulf %157, %161 : vector<8x128xf32>
    %c4_i32 = arith.constant 4 : i32
    %163 = arith.index_cast %c4_i32 : i32 to index
    %c0_65 = arith.constant 0 : index
    %c0_66 = arith.constant 0 : index
    %164 = vector.load %arg11[%163, %c0_65, %c0_66] : memref<8x8x512xf32, #tpu.memory_space<vmem>>, vector<1x8x512xf32>
    %165 = vector.shape_cast %164 : vector<1x8x512xf32> to vector<8x512xf32>
    %166 = arith.truncf %162 : vector<8x128xf32> to vector<8x128xbf16>
    %cst_67 = arith.constant dense<0.000000e+00> : vector<8x512xf32>
    %167 = tpu.matmul %166, %12, %cst_67 {dimension_numbers = #tpu.dot_dimension_numbers<[1], [0], [0], [1], [0, 0, 1, 1], [], []>} : vector<8x128xbf16>, vector<128x512xbf16>, vector<8x512xf32> -> vector<8x512xf32>
    %168 = arith.addf %165, %167 : vector<8x512xf32>
    %169 = vector.extract_strided_slice %168 {offsets = [0, 0], sizes = [8, 128], strides = [1, 1]} : vector<8x512xf32> to vector<8x128xf32>
    %cst_68 = arith.constant 5.000000e-01 : f32
    %170 = vector.broadcast %cst_68 : f32 to vector<8x128xf32>
    %171 = arith.mulf %170, %169 : vector<8x128xf32>
    %172 = math.tanh %171 : vector<8x128xf32>
    %cst_69 = arith.constant 1.000000e+00 : f32
    %173 = vector.broadcast %cst_69 : f32 to vector<8x128xf32>
    %174 = arith.addf %172, %173 : vector<8x128xf32>
    %cst_70 = arith.constant 5.000000e-01 : f32
    %175 = vector.broadcast %cst_70 : f32 to vector<8x128xf32>
    %176 = arith.mulf %175, %174 : vector<8x128xf32>
    %177 = vector.extract_strided_slice %168 {offsets = [0, 128], sizes = [8, 128], strides = [1, 1]} : vector<8x512xf32> to vector<8x128xf32>
    %cst_71 = arith.constant 5.000000e-01 : f32
    %178 = vector.broadcast %cst_71 : f32 to vector<8x128xf32>
    %179 = arith.mulf %178, %177 : vector<8x128xf32>
    %180 = math.tanh %179 : vector<8x128xf32>
    %cst_72 = arith.constant 1.000000e+00 : f32
    %181 = vector.broadcast %cst_72 : f32 to vector<8x128xf32>
    %182 = arith.addf %180, %181 : vector<8x128xf32>
    %cst_73 = arith.constant 5.000000e-01 : f32
    %183 = vector.broadcast %cst_73 : f32 to vector<8x128xf32>
    %184 = arith.mulf %183, %182 : vector<8x128xf32>
    %185 = vector.extract_strided_slice %168 {offsets = [0, 256], sizes = [8, 128], strides = [1, 1]} : vector<8x512xf32> to vector<8x128xf32>
    %186 = math.tanh %185 : vector<8x128xf32>
    %187 = vector.extract_strided_slice %168 {offsets = [0, 384], sizes = [8, 128], strides = [1, 1]} : vector<8x512xf32> to vector<8x128xf32>
    %cst_74 = arith.constant 5.000000e-01 : f32
    %188 = vector.broadcast %cst_74 : f32 to vector<8x128xf32>
    %189 = arith.mulf %188, %187 : vector<8x128xf32>
    %190 = math.tanh %189 : vector<8x128xf32>
    %cst_75 = arith.constant 1.000000e+00 : f32
    %191 = vector.broadcast %cst_75 : f32 to vector<8x128xf32>
    %192 = arith.addf %190, %191 : vector<8x128xf32>
    %cst_76 = arith.constant 5.000000e-01 : f32
    %193 = vector.broadcast %cst_76 : f32 to vector<8x128xf32>
    %194 = arith.mulf %193, %192 : vector<8x128xf32>
    %195 = arith.mulf %184, %160 : vector<8x128xf32>
    %196 = arith.mulf %176, %186 : vector<8x128xf32>
    %197 = arith.addf %195, %196 : vector<8x128xf32>
    %198 = math.tanh %197 : vector<8x128xf32>
    %199 = arith.mulf %194, %198 : vector<8x128xf32>
    %c5_i32 = arith.constant 5 : i32
    %200 = arith.index_cast %c5_i32 : i32 to index
    %c0_77 = arith.constant 0 : index
    %c0_78 = arith.constant 0 : index
    %201 = vector.load %arg11[%200, %c0_77, %c0_78] : memref<8x8x512xf32, #tpu.memory_space<vmem>>, vector<1x8x512xf32>
    %202 = vector.shape_cast %201 : vector<1x8x512xf32> to vector<8x512xf32>
    %203 = arith.truncf %199 : vector<8x128xf32> to vector<8x128xbf16>
    %cst_79 = arith.constant dense<0.000000e+00> : vector<8x512xf32>
    %204 = tpu.matmul %203, %12, %cst_79 {dimension_numbers = #tpu.dot_dimension_numbers<[1], [0], [0], [1], [0, 0, 1, 1], [], []>} : vector<8x128xbf16>, vector<128x512xbf16>, vector<8x512xf32> -> vector<8x512xf32>
    %205 = arith.addf %202, %204 : vector<8x512xf32>
    %206 = vector.extract_strided_slice %205 {offsets = [0, 0], sizes = [8, 128], strides = [1, 1]} : vector<8x512xf32> to vector<8x128xf32>
    %cst_80 = arith.constant 5.000000e-01 : f32
    %207 = vector.broadcast %cst_80 : f32 to vector<8x128xf32>
    %208 = arith.mulf %207, %206 : vector<8x128xf32>
    %209 = math.tanh %208 : vector<8x128xf32>
    %cst_81 = arith.constant 1.000000e+00 : f32
    %210 = vector.broadcast %cst_81 : f32 to vector<8x128xf32>
    %211 = arith.addf %209, %210 : vector<8x128xf32>
    %cst_82 = arith.constant 5.000000e-01 : f32
    %212 = vector.broadcast %cst_82 : f32 to vector<8x128xf32>
    %213 = arith.mulf %212, %211 : vector<8x128xf32>
    %214 = vector.extract_strided_slice %205 {offsets = [0, 128], sizes = [8, 128], strides = [1, 1]} : vector<8x512xf32> to vector<8x128xf32>
    %cst_83 = arith.constant 5.000000e-01 : f32
    %215 = vector.broadcast %cst_83 : f32 to vector<8x128xf32>
    %216 = arith.mulf %215, %214 : vector<8x128xf32>
    %217 = math.tanh %216 : vector<8x128xf32>
    %cst_84 = arith.constant 1.000000e+00 : f32
    %218 = vector.broadcast %cst_84 : f32 to vector<8x128xf32>
    %219 = arith.addf %217, %218 : vector<8x128xf32>
    %cst_85 = arith.constant 5.000000e-01 : f32
    %220 = vector.broadcast %cst_85 : f32 to vector<8x128xf32>
    %221 = arith.mulf %220, %219 : vector<8x128xf32>
    %222 = vector.extract_strided_slice %205 {offsets = [0, 256], sizes = [8, 128], strides = [1, 1]} : vector<8x512xf32> to vector<8x128xf32>
    %223 = math.tanh %222 : vector<8x128xf32>
    %224 = vector.extract_strided_slice %205 {offsets = [0, 384], sizes = [8, 128], strides = [1, 1]} : vector<8x512xf32> to vector<8x128xf32>
    %cst_86 = arith.constant 5.000000e-01 : f32
    %225 = vector.broadcast %cst_86 : f32 to vector<8x128xf32>
    %226 = arith.mulf %225, %224 : vector<8x128xf32>
    %227 = math.tanh %226 : vector<8x128xf32>
    %cst_87 = arith.constant 1.000000e+00 : f32
    %228 = vector.broadcast %cst_87 : f32 to vector<8x128xf32>
    %229 = arith.addf %227, %228 : vector<8x128xf32>
    %cst_88 = arith.constant 5.000000e-01 : f32
    %230 = vector.broadcast %cst_88 : f32 to vector<8x128xf32>
    %231 = arith.mulf %230, %229 : vector<8x128xf32>
    %232 = arith.mulf %221, %197 : vector<8x128xf32>
    %233 = arith.mulf %213, %223 : vector<8x128xf32>
    %234 = arith.addf %232, %233 : vector<8x128xf32>
    %235 = math.tanh %234 : vector<8x128xf32>
    %236 = arith.mulf %231, %235 : vector<8x128xf32>
    %c6_i32 = arith.constant 6 : i32
    %237 = arith.index_cast %c6_i32 : i32 to index
    %c0_89 = arith.constant 0 : index
    %c0_90 = arith.constant 0 : index
    %238 = vector.load %arg11[%237, %c0_89, %c0_90] : memref<8x8x512xf32, #tpu.memory_space<vmem>>, vector<1x8x512xf32>
    %239 = vector.shape_cast %238 : vector<1x8x512xf32> to vector<8x512xf32>
    %240 = arith.truncf %236 : vector<8x128xf32> to vector<8x128xbf16>
    %cst_91 = arith.constant dense<0.000000e+00> : vector<8x512xf32>
    %241 = tpu.matmul %240, %12, %cst_91 {dimension_numbers = #tpu.dot_dimension_numbers<[1], [0], [0], [1], [0, 0, 1, 1], [], []>} : vector<8x128xbf16>, vector<128x512xbf16>, vector<8x512xf32> -> vector<8x512xf32>
    %242 = arith.addf %239, %241 : vector<8x512xf32>
    %243 = vector.extract_strided_slice %242 {offsets = [0, 0], sizes = [8, 128], strides = [1, 1]} : vector<8x512xf32> to vector<8x128xf32>
    %cst_92 = arith.constant 5.000000e-01 : f32
    %244 = vector.broadcast %cst_92 : f32 to vector<8x128xf32>
    %245 = arith.mulf %244, %243 : vector<8x128xf32>
    %246 = math.tanh %245 : vector<8x128xf32>
    %cst_93 = arith.constant 1.000000e+00 : f32
    %247 = vector.broadcast %cst_93 : f32 to vector<8x128xf32>
    %248 = arith.addf %246, %247 : vector<8x128xf32>
    %cst_94 = arith.constant 5.000000e-01 : f32
    %249 = vector.broadcast %cst_94 : f32 to vector<8x128xf32>
    %250 = arith.mulf %249, %248 : vector<8x128xf32>
    %251 = vector.extract_strided_slice %242 {offsets = [0, 128], sizes = [8, 128], strides = [1, 1]} : vector<8x512xf32> to vector<8x128xf32>
    %cst_95 = arith.constant 5.000000e-01 : f32
    %252 = vector.broadcast %cst_95 : f32 to vector<8x128xf32>
    %253 = arith.mulf %252, %251 : vector<8x128xf32>
    %254 = math.tanh %253 : vector<8x128xf32>
    %cst_96 = arith.constant 1.000000e+00 : f32
    %255 = vector.broadcast %cst_96 : f32 to vector<8x128xf32>
    %256 = arith.addf %254, %255 : vector<8x128xf32>
    %cst_97 = arith.constant 5.000000e-01 : f32
    %257 = vector.broadcast %cst_97 : f32 to vector<8x128xf32>
    %258 = arith.mulf %257, %256 : vector<8x128xf32>
    %259 = vector.extract_strided_slice %242 {offsets = [0, 256], sizes = [8, 128], strides = [1, 1]} : vector<8x512xf32> to vector<8x128xf32>
    %260 = math.tanh %259 : vector<8x128xf32>
    %261 = vector.extract_strided_slice %242 {offsets = [0, 384], sizes = [8, 128], strides = [1, 1]} : vector<8x512xf32> to vector<8x128xf32>
    %cst_98 = arith.constant 5.000000e-01 : f32
    %262 = vector.broadcast %cst_98 : f32 to vector<8x128xf32>
    %263 = arith.mulf %262, %261 : vector<8x128xf32>
    %264 = math.tanh %263 : vector<8x128xf32>
    %cst_99 = arith.constant 1.000000e+00 : f32
    %265 = vector.broadcast %cst_99 : f32 to vector<8x128xf32>
    %266 = arith.addf %264, %265 : vector<8x128xf32>
    %cst_100 = arith.constant 5.000000e-01 : f32
    %267 = vector.broadcast %cst_100 : f32 to vector<8x128xf32>
    %268 = arith.mulf %267, %266 : vector<8x128xf32>
    %269 = arith.mulf %258, %234 : vector<8x128xf32>
    %270 = arith.mulf %250, %260 : vector<8x128xf32>
    %271 = arith.addf %269, %270 : vector<8x128xf32>
    %272 = math.tanh %271 : vector<8x128xf32>
    %273 = arith.mulf %268, %272 : vector<8x128xf32>
    %c7_i32 = arith.constant 7 : i32
    %274 = arith.index_cast %c7_i32 : i32 to index
    %c0_101 = arith.constant 0 : index
    %c0_102 = arith.constant 0 : index
    %275 = vector.load %arg11[%274, %c0_101, %c0_102] : memref<8x8x512xf32, #tpu.memory_space<vmem>>, vector<1x8x512xf32>
    %276 = vector.shape_cast %275 : vector<1x8x512xf32> to vector<8x512xf32>
    %277 = arith.truncf %273 : vector<8x128xf32> to vector<8x128xbf16>
    %cst_103 = arith.constant dense<0.000000e+00> : vector<8x512xf32>
    %278 = tpu.matmul %277, %12, %cst_103 {dimension_numbers = #tpu.dot_dimension_numbers<[1], [0], [0], [1], [0, 0, 1, 1], [], []>} : vector<8x128xbf16>, vector<128x512xbf16>, vector<8x512xf32> -> vector<8x512xf32>
    %279 = arith.addf %276, %278 : vector<8x512xf32>
    %280 = vector.extract_strided_slice %279 {offsets = [0, 0], sizes = [8, 128], strides = [1, 1]} : vector<8x512xf32> to vector<8x128xf32>
    %cst_104 = arith.constant 5.000000e-01 : f32
    %281 = vector.broadcast %cst_104 : f32 to vector<8x128xf32>
    %282 = arith.mulf %281, %280 : vector<8x128xf32>
    %283 = math.tanh %282 : vector<8x128xf32>
    %cst_105 = arith.constant 1.000000e+00 : f32
    %284 = vector.broadcast %cst_105 : f32 to vector<8x128xf32>
    %285 = arith.addf %283, %284 : vector<8x128xf32>
    %cst_106 = arith.constant 5.000000e-01 : f32
    %286 = vector.broadcast %cst_106 : f32 to vector<8x128xf32>
    %287 = arith.mulf %286, %285 : vector<8x128xf32>
    %288 = vector.extract_strided_slice %279 {offsets = [0, 128], sizes = [8, 128], strides = [1, 1]} : vector<8x512xf32> to vector<8x128xf32>
    %cst_107 = arith.constant 5.000000e-01 : f32
    %289 = vector.broadcast %cst_107 : f32 to vector<8x128xf32>
    %290 = arith.mulf %289, %288 : vector<8x128xf32>
    %291 = math.tanh %290 : vector<8x128xf32>
    %cst_108 = arith.constant 1.000000e+00 : f32
    %292 = vector.broadcast %cst_108 : f32 to vector<8x128xf32>
    %293 = arith.addf %291, %292 : vector<8x128xf32>
    %cst_109 = arith.constant 5.000000e-01 : f32
    %294 = vector.broadcast %cst_109 : f32 to vector<8x128xf32>
    %295 = arith.mulf %294, %293 : vector<8x128xf32>
    %296 = vector.extract_strided_slice %279 {offsets = [0, 256], sizes = [8, 128], strides = [1, 1]} : vector<8x512xf32> to vector<8x128xf32>
    %297 = math.tanh %296 : vector<8x128xf32>
    %298 = vector.extract_strided_slice %279 {offsets = [0, 384], sizes = [8, 128], strides = [1, 1]} : vector<8x512xf32> to vector<8x128xf32>
    %cst_110 = arith.constant 5.000000e-01 : f32
    %299 = vector.broadcast %cst_110 : f32 to vector<8x128xf32>
    %300 = arith.mulf %299, %298 : vector<8x128xf32>
    %301 = math.tanh %300 : vector<8x128xf32>
    %cst_111 = arith.constant 1.000000e+00 : f32
    %302 = vector.broadcast %cst_111 : f32 to vector<8x128xf32>
    %303 = arith.addf %301, %302 : vector<8x128xf32>
    %cst_112 = arith.constant 5.000000e-01 : f32
    %304 = vector.broadcast %cst_112 : f32 to vector<8x128xf32>
    %305 = arith.mulf %304, %303 : vector<8x128xf32>
    %306 = arith.mulf %295, %271 : vector<8x128xf32>
    %307 = arith.mulf %287, %297 : vector<8x128xf32>
    %308 = arith.addf %306, %307 : vector<8x128xf32>
    %309 = math.tanh %308 : vector<8x128xf32>
    %310 = arith.mulf %305, %309 : vector<8x128xf32>
    %c8_i32 = arith.constant 8 : i32
    %c0_113 = arith.constant 0 : index
    %c0_114 = arith.constant 0 : index
    %311 = vector.load %arg9[%c0_113, %c0_114] : memref<8x128xf32, #tpu.memory_space<vmem>>, vector<8x128xf32>
    tpu.vector_store %arg9[%c0_113, %c0_114], %310 {strides = array<i32>} : memref<8x128xf32, #tpu.memory_space<vmem>>, vector<8x128xf32>,
    %c0_115 = arith.constant 0 : index
    %c0_116 = arith.constant 0 : index
    %312 = vector.load %arg10[%c0_115, %c0_116] : memref<8x128xf32, #tpu.memory_space<vmem>>, vector<8x128xf32>
    tpu.vector_store %arg10[%c0_115, %c0_116], %308 {strides = array<i32>} : memref<8x128xf32, #tpu.memory_space<vmem>>, vector<8x128xf32>,
    %c0_i32_117 = arith.constant 0 : i32
    %313 = arith.cmpi eq, %arg1, %c0_i32_117 : i32
    %314 = arith.extui %313 : i1 to i32
    %c0_i32_118 = arith.constant 0 : i32
    %315 = arith.cmpi ne, %314, %c0_i32_118 : i32
    scf.if %315 {
      %316 = arith.truncf %310 : vector<8x128xf32> to vector<8x128xbf16>
      %c0_119 = arith.constant 0 : index
      %c0_120 = arith.constant 0 : index
      %317 = vector.load %arg6[%c0_119, %c0_120] : memref<128x128xbf16, #tpu.memory_space<vmem>>, vector<128x128xbf16>
      %cst_121 = arith.constant dense<0.000000e+00> : vector<8x128xf32>
      %318 = tpu.matmul %316, %317, %cst_121 {dimension_numbers = #tpu.dot_dimension_numbers<[1], [0], [0], [1], [0, 0, 1, 1], [], []>} : vector<8x128xbf16>, vector<128x128xbf16>, vector<8x128xf32> -> vector<8x128xf32>
      %c0_122 = arith.constant 0 : index
      %c0_123 = arith.constant 0 : index
      %319 = vector.load %arg7[%c0_122, %c0_123] : memref<1x128xf32, #tpu.memory_space<vmem>>, vector<1x128xf32>
      %320 = vector.broadcast %319 : vector<1x128xf32> to vector<8x128xf32>
      %321 = arith.addf %318, %320 : vector<8x128xf32>
      %cst_124 = arith.constant dense<0xFF800000> : vector<8xf32>
      %322 = vector.multi_reduction <maximumf>, %321, %cst_124 [1] : vector<8x128xf32> to vector<8xf32>
      %323 = vector.shape_cast %322 : vector<8xf32> to vector<8x1xf32>
      %324 = vector.broadcast %323 : vector<8x1xf32> to vector<8x128xf32>
      %325 = arith.subf %321, %324 : vector<8x128xf32>
      %326 = math.exp %325 : vector<8x128xf32>
      %cst_125 = arith.constant dense<0.000000e+00> : vector<8xf32>
      %327 = vector.multi_reduction <add>, %326, %cst_125 [1] : vector<8x128xf32> to vector<8xf32>
      %328 = vector.shape_cast %327 : vector<8xf32> to vector<8x1xf32>
      %329 = math.log %328 : vector<8x1xf32>
      %330 = vector.broadcast %329 : vector<8x1xf32> to vector<8x128xf32>
      %331 = arith.subf %325, %330 : vector<8x128xf32>
      %c0_126 = arith.constant 0 : index
      %c0_127 = arith.constant 0 : index
      %332 = vector.load %arg8[%c0_126, %c0_127] : memref<8x128xf32, #tpu.memory_space<vmem>>, vector<8x128xf32>
      tpu.vector_store %arg8[%c0_126, %c0_127], %331 {strides = array<i32>} : memref<8x128xf32, #tpu.memory_space<vmem>>, vector<8x128xf32>,
    } else {
    }
    return
  }
  func.func @transform_0(%arg0: i32, %arg1: i32) -> (i32, i32, i32) {
    %c0_i32 = arith.constant 0 : i32
    %c0_i32_0 = arith.constant 0 : i32
    return %arg1, %arg0, %c0_i32 : i32, i32, i32
  }
  func.func @transform_1(%arg0: i32, %arg1: i32) -> (i32, i32) {
    %c0_i32 = arith.constant 0 : i32
    %c0_i32_0 = arith.constant 0 : i32
    %c0_i32_1 = arith.constant 0 : i32
    return %c0_i32, %c0_i32_0 : i32, i32
  }
  func.func @transform_2(%arg0: i32, %arg1: i32) -> (i32, i32) {
    %c0_i32 = arith.constant 0 : i32
    %c0_i32_0 = arith.constant 0 : i32
    %c0_i32_1 = arith.constant 0 : i32
    return %c0_i32, %c0_i32_0 : i32, i32
  }
  func.func @transform_3(%arg0: i32, %arg1: i32) -> (i32, i32) {
    %c0_i32 = arith.constant 0 : i32
    %c0_i32_0 = arith.constant 0 : i32
    %c0_i32_1 = arith.constant 0 : i32
    return %c0_i32, %c0_i32_0 : i32, i32
  }
  func.func @transform_4(%arg0: i32, %arg1: i32) -> (i32, i32) {
    %c0_i32 = arith.constant 0 : i32
    %c0_i32_0 = arith.constant 0 : i32
    %c0_i32_1 = arith.constant 0 : i32
    return %c0_i32, %c0_i32_0 : i32, i32
  }
  func.func @transform_5(%arg0: i32, %arg1: i32) -> (i32, i32) {
    %c0_i32 = arith.constant 0 : i32
    %c0_i32_0 = arith.constant 0 : i32
    %c0_i32_1 = arith.constant 0 : i32
    return %c0_i32, %c0_i32_0 : i32, i32
  }
  func.func @transform_6(%arg0: i32, %arg1: i32) -> (i32, i32) {
    %c0_i32 = arith.constant 0 : i32
    %c0_i32_0 = arith.constant 0 : i32
    return %arg0, %c0_i32 : i32, i32
  }
}

</mosaic_0001>

<llo_original>
// kernel: topic_model_forward.1
$region0: #{topic_model_forward.1}
  #allocation0 [shape = 'u32[]', space=smem, size = 0x4, offset = 0x4, fixed_abs, tag = 'smem constant byte address 0x4 - core index']
  #allocation1 [shape = 'u32[144,128]{1,0:T(1,128)}', space=vmem, size = 0x12000, scoped, tag = 'internal scratch']
  #allocation2 [shape = 'f32[8,128]{1,0:T(8,128)}', space=vmem, size = 0x1000, scoped, tag = 'scratch operand']
  #allocation3 [shape = 'f32[8,128]{1,0:T(8,128)}', space=vmem, size = 0x1000, scoped, tag = 'scratch operand']
  #allocation4 [shape = 'f32[8,8,512]{2,1,0:T(8,128)}', space=vmem, size = 0x20000, scoped, tag = 'scratch operand']
  %s0 = inlined_call_operand.vmem [shape: bf16[8,8,384], index: 0, kind: input, shape index: {}]
  %s1 = inlined_call_operand.vmem [shape: bf16[384,512], index: 1, kind: input, shape index: {}]
  %s2 = inlined_call_operand.vmem [shape: f32[1,512], index: 2, kind: input, shape index: {}]
  %s3 = inlined_call_operand.vmem [shape: bf16[128,512], index: 3, kind: input, shape index: {}]
  %s4 = inlined_call_operand.vmem [shape: bf16[128,128], index: 4, kind: input, shape index: {}]
  %s5 = inlined_call_operand.vmem [shape: f32[1,128], index: 5, kind: input, shape index: {}]
  %s6 = inlined_call_operand.vmem [shape: f32[8,128], index: 6, kind: output, shape index: {}]
  %s7 = sld [smem:[#allocation0]]
  $region42: #{topic_model_forward.1} parent=0
    _
  %s9 = ssub.s32 1, %s7
  %s10 = scalar_select 0, %s9, %s7
  // Predicated region
  $region2: #{topic_model_forward.1} parent=0 // pred_check
    _
  $region3: #{topic_model_forward.1} parent=0 // pred_check_branch
    %12 = sbr.rel (0) target = $region5
  $region4: #{topic_model_forward.1} parent=0 // pred_region
    _
  $region5: #{topic_model_forward.1} parent=0 // pred_fallthru
    _
  // Predicated region
  $region6: #{topic_model_forward.1} parent=0 // pred_check
    _
  $region7: #{topic_model_forward.1} parent=0 // pred_check_branch
    %14 = sbr.rel (0) target = $region9
  $region8: #{topic_model_forward.1} parent=0 // pred_region
    _
  $region9: #{topic_model_forward.1} parent=0 // pred_fallthru
    _
  // Predicated region
  $region10: #{topic_model_forward.1} parent=0 // pred_check
    _
  $region11: #{topic_model_forward.1} parent=0 // pred_check_branch
    %16 = sbr.rel (0) target = $region13
  $region12: #{topic_model_forward.1} parent=0 // pred_region
    _
  $region13: #{topic_model_forward.1} parent=0 // pred_fallthru
    _
  // Predicated region
  $region14: #{topic_model_forward.1} parent=0 // pred_check
    _
  $region15: #{topic_model_forward.1} parent=0 // pred_check_branch
    %18 = sbr.rel (0) target = $region17
  $region16: #{topic_model_forward.1} parent=0 // pred_region
    _
  $region17: #{topic_model_forward.1} parent=0 // pred_fallthru
    _
  // Predicated region
  $region18: #{topic_model_forward.1} parent=0 // pred_check
    _
  $region19: #{topic_model_forward.1} parent=0 // pred_check_branch
    %20 = sbr.rel (0) target = $region21
  $region20: #{topic_model_forward.1} parent=0 // pred_region
    _
  $region21: #{topic_model_forward.1} parent=0 // pred_fallthru
    _
  // Predicated region
  $region22: #{topic_model_forward.1} parent=0 // pred_check
    _
  $region23: #{topic_model_forward.1} parent=0 // pred_check_branch
    %22 = sbr.rel (0) target = $region25
  $region24: #{topic_model_forward.1} parent=0 // pred_region
    _
  $region25: #{topic_model_forward.1} parent=0 // pred_fallthru
    _
  %p24 = scmp.eq.s32.totalorder 0, 0
  // Predicated region
  $region26: #{topic_model_forward.1} parent=0 // pred_check
    %p25 = pneg %p24
  $region27: #{topic_model_forward.1} parent=0 // pred_check_branch
    %27 = sbr.rel (%p25) target = $region29
  $region28: #{topic_model_forward.1} parent=0 // pred_region
    %28 = vst [vmem:[#allocation2] sm:$0xff] 0.0
    %29 = vst [vmem:[#allocation3] sm:$0xff] 0.0
  $region29: #{topic_model_forward.1} parent=0 // pred_fallthru
    _
  %v30 = vld [vmem:[%s0] sm:$0xff]
  %v31 = vld [vmem:[%s0 + $0x8] sm:$0xf]
  %v32 = vld [vmem:[%s0 + $0xc] sm:$0xff]
  %v33 = vld [vmem:[%s0 + $0x14] sm:$0xf]
  %v34 = vld [vmem:[%s0 + $0x18] sm:$0xff]
  %v35 = vld [vmem:[%s0 + $0x20] sm:$0xf]
  %v36 = vld [vmem:[%s0 + $0x24] sm:$0xff]
  %v37 = vld [vmem:[%s0 + $0x2c] sm:$0xf]
  %v38 = vld [vmem:[%s0 + $0x30] sm:$0xff]
  %v39 = vld [vmem:[%s0 + $0x38] sm:$0xf]
  %v40 = vld [vmem:[%s0 + $0x3c] sm:$0xff]
  %v41 = vld [vmem:[%s0 + $0x44] sm:$0xf]
  %v42 = vld [vmem:[%s0 + $0x48] sm:$0xff]
  %v43 = vld [vmem:[%s0 + $0x50] sm:$0xf]
  %v44 = vld [vmem:[%s0 + $0x54] sm:$0xff]
  %v45 = vld [vmem:[%s0 + $0x5c] sm:$0xf]
  %v46 = vld [vmem:[%s1] sm:$0xff]
  %v47 = vld [vmem:[%s1 + $0x8] sm:$0xff]
  %v48 = vld [vmem:[%s1 + $0x10] sm:$0xff]
  %v49 = vld [vmem:[%s1 + $0x18] sm:$0xff]
  %v50 = vld [vmem:[%s1 + $0x20] sm:$0xff]
  %v51 = vld [vmem:[%s1 + $0x28] sm:$0xff]
  %v52 = vld [vmem:[%s1 + $0x30] sm:$0xff]
  %v53 = vld [vmem:[%s1 + $0x38] sm:$0xff]
  %v54 = vld [vmem:[%s1 + $0x40] sm:$0xff]
  %v55 = vld [vmem:[%s1 + $0x48] sm:$0xff]
  %v56 = vld [vmem:[%s1 + $0x50] sm:$0xff]
  %v57 = vld [vmem:[%s1 + $0x58] sm:$0xff]
  %v58 = vld [vmem:[%s1 + $0x60] sm:$0xff]
  %v59 = vld [vmem:[%s1 + $0x68] sm:$0xff]
  %v60 = vld [vmem:[%s1 + $0x70] sm:$0xff]
  %v61 = vld [vmem:[%s1 + $0x78] sm:$0xff]
  %v62 = vld [vmem:[%s1 + $0x80] sm:$0xff]
  %v63 = vld [vmem:[%s1 + $0x88] sm:$0xff]
  %v64 = vld [vmem:[%s1 + $0x90] sm:$0xff]
  %v65 = vld [vmem:[%s1 + $0x98] sm:$0xff]
  %v66 = vld [vmem:[%s1 + $0xa0] sm:$0xff]
  %v67 = vld [vmem:[%s1 + $0xa8] sm:$0xff]
  %v68 = vld [vmem:[%s1 + $0xb0] sm:$0xff]
  %v69 = vld [vmem:[%s1 + $0xb8] sm:$0xff]
  %v70 = vld [vmem:[%s1 + $0xc0] sm:$0xff]
  %v71 = vld [vmem:[%s1 + $0xc8] sm:$0xff]
  %v72 = vld [vmem:[%s1 + $0xd0] sm:$0xff]
  %v73 = vld [vmem:[%s1 + $0xd8] sm:$0xff]
  %v74 = vld [vmem:[%s1 + $0xe0] sm:$0xff]
  %v75 = vld [vmem:[%s1 + $0xe8] sm:$0xff]
  %v76 = vld [vmem:[%s1 + $0xf0] sm:$0xff]
  %v77 = vld [vmem:[%s1 + $0xf8] sm:$0xff]
  %v78 = vld [vmem:[%s1 + $0x100] sm:$0xff]
  %v79 = vld [vmem:[%s1 + $0x108] sm:$0xff]
  %v80 = vld [vmem:[%s1 + $0x110] sm:$0xff]
  %v81 = vld [vmem:[%s1 + $0x118] sm:$0xff]
  %v82 = vld [vmem:[%s1 + $0x120] sm:$0xff]
  %v83 = vld [vmem:[%s1 + $0x128] sm:$0xff]
  %v84 = vld [vmem:[%s1 + $0x130] sm:$0xff]
  %v85 = vld [vmem:[%s1 + $0x138] sm:$0xff]
  %v86 = vld [vmem:[%s1 + $0x140] sm:$0xff]
  %v87 = vld [vmem:[%s1 + $0x148] sm:$0xff]
  %v88 = vld [vmem:[%s1 + $0x150] sm:$0xff]
  %v89 = vld [vmem:[%s1 + $0x158] sm:$0xff]
  %v90 = vld [vmem:[%s1 + $0x160] sm:$0xff]
  %v91 = vld [vmem:[%s1 + $0x168] sm:$0xff]
  %v92 = vld [vmem:[%s1 + $0x170] sm:$0xff]
  %v93 = vld [vmem:[%s1 + $0x178] sm:$0xff]
  %v94 = vld [vmem:[%s1 + $0x180] sm:$0xff]
  %v95 = vld [vmem:[%s1 + $0x188] sm:$0xff]
  %v96 = vld [vmem:[%s1 + $0x190] sm:$0xff]
  %v97 = vld [vmem:[%s1 + $0x198] sm:$0xff]
  %v98 = vld [vmem:[%s1 + $0x1a0] sm:$0xff]
  %v99 = vld [vmem:[%s1 + $0x1a8] sm:$0xff]
  %v100 = vld [vmem:[%s1 + $0x1b0] sm:$0xff]
  %v101 = vld [vmem:[%s1 + $0x1b8] sm:$0xff]
  %v102 = vld [vmem:[%s1 + $0x1c0] sm:$0xff]
  %v103 = vld [vmem:[%s1 + $0x1c8] sm:$0xff]
  %v104 = vld [vmem:[%s1 + $0x1d0] sm:$0xff]
  %v105 = vld [vmem:[%s1 + $0x1d8] sm:$0xff]
  %v106 = vld [vmem:[%s1 + $0x1e0] sm:$0xff]
  %v107 = vld [vmem:[%s1 + $0x1e8] sm:$0xff]
  %v108 = vld [vmem:[%s1 + $0x1f0] sm:$0xff]
  %v109 = vld [vmem:[%s1 + $0x1f8] sm:$0xff]
  %v110 = vld [vmem:[%s1 + $0x200] sm:$0xff]
  %v111 = vld [vmem:[%s1 + $0x208] sm:$0xff]
  %v112 = vld [vmem:[%s1 + $0x210] sm:$0xff]
  %v113 = vld [vmem:[%s1 + $0x218] sm:$0xff]
  %v114 = vld [vmem:[%s1 + $0x220] sm:$0xff]
  %v115 = vld [vmem:[%s1 + $0x228] sm:$0xff]
  %v116 = vld [vmem:[%s1 + $0x230] sm:$0xff]
  %v117 = vld [vmem:[%s1 + $0x238] sm:$0xff]
  %v118 = vld [vmem:[%s1 + $0x240] sm:$0xff]
  %v119 = vld [vmem:[%s1 + $0x248] sm:$0xff]
  %v120 = vld [vmem:[%s1 + $0x250] sm:$0xff]
  %v121 = vld [vmem:[%s1 + $0x258] sm:$0xff]
  %v122 = vld [vmem:[%s1 + $0x260] sm:$0xff]
  %v123 = vld [vmem:[%s1 + $0x268] sm:$0xff]
  %v124 = vld [vmem:[%s1 + $0x270] sm:$0xff]
  %v125 = vld [vmem:[%s1 + $0x278] sm:$0xff]
  %v126 = vld [vmem:[%s1 + $0x280] sm:$0xff]
  %v127 = vld [vmem:[%s1 + $0x288] sm:$0xff]
  %v128 = vld [vmem:[%s1 + $0x290] sm:$0xff]
  %v129 = vld [vmem:[%s1 + $0x298] sm:$0xff]
  %v130 = vld [vmem:[%s1 + $0x2a0] sm:$0xff]
  %v131 = vld [vmem:[%s1 + $0x2a8] sm:$0xff]
  %v132 = vld [vmem:[%s1 + $0x2b0] sm:$0xff]
  %v133 = vld [vmem:[%s1 + $0x2b8] sm:$0xff]
  %v134 = vld [vmem:[%s1 + $0x2c0] sm:$0xff]
  %v135 = vld [vmem:[%s1 + $0x2c8] sm:$0xff]
  %v136 = vld [vmem:[%s1 + $0x2d0] sm:$0xff]
  %v137 = vld [vmem:[%s1 + $0x2d8] sm:$0xff]
  %v138 = vld [vmem:[%s1 + $0x2e0] sm:$0xff]
  %v139 = vld [vmem:[%s1 + $0x2e8] sm:$0xff]
  %v140 = vld [vmem:[%s1 + $0x2f0] sm:$0xff]
  %v141 = vld [vmem:[%s1 + $0x2f8] sm:$0xff]
  %v142 = vld [vmem:[%s2] sm:$0xf]
  %v144 = vlaneseq
  %v145 = vshrl.u32 %v144, 7
  %v146 = vsub.s32 0, %v145
  %v147 = vrot.slane %v142, %v146
  %v148 = vlaneseq
  %v149 = vshrl.u32 %v148, 7
  %v150 = vsub.s32 1, %v149
  %v151 = vrot.slane %v142, %v150
  %v152 = vlaneseq
  %v153 = vshrl.u32 %v152, 7
  %v154 = vsub.s32 2, %v153
  %v155 = vrot.slane %v142, %v154
  %v156 = vlaneseq
  %v157 = vshrl.u32 %v156, 7
  %v158 = vsub.s32 3, %v157
  %v159 = vrot.slane %v142, %v158
  %v180 = vunpack.c.l.b16 %v30
  %v181 = vunpack.c.h.b16 %v30
  %v182 = vunpack.c.l.b16 %v31
  %v183 = vunpack.c.l.b16 %v32
  %v184 = vunpack.c.h.b16 %v32
  %v185 = vunpack.c.l.b16 %v33
  %v186 = vunpack.c.l.b16 %v34
  %v187 = vunpack.c.h.b16 %v34
  %v188 = vunpack.c.l.b16 %v35
  %v189 = vunpack.c.l.b16 %v36
  %v190 = vunpack.c.h.b16 %v36
  %v191 = vunpack.c.l.b16 %v37
  %v192 = vunpack.c.l.b16 %v38
  %v193 = vunpack.c.h.b16 %v38
  %v194 = vunpack.c.l.b16 %v39
  %v195 = vunpack.c.l.b16 %v40
  %v196 = vunpack.c.h.b16 %v40
  %v197 = vunpack.c.l.b16 %v41
  %v198 = vunpack.c.l.b16 %v42
  %v199 = vunpack.c.h.b16 %v42
  %v200 = vunpack.c.l.b16 %v43
  %v201 = vunpack.c.l.b16 %v44
  %v202 = vunpack.c.h.b16 %v44
  %v203 = vunpack.c.l.b16 %v45
  %v204 = vpack.c.b16 %v183, %v180
  %v205 = vpack.c.b16 %v184, %v181
  %v206 = vpack.c.b16 %v185, %v182
  %v207 = vpack.c.b16 %v189, %v186
  %v208 = vpack.c.b16 %v190, %v187
  %v209 = vpack.c.b16 %v191, %v188
  %v210 = vpack.c.b16 %v195, %v192
  %v211 = vpack.c.b16 %v196, %v193
  %v212 = vpack.c.b16 %v197, %v194
  %v213 = vpack.c.b16 %v201, %v198
  %v214 = vpack.c.b16 %v202, %v199
  %v215 = vpack.c.b16 %v203, %v200
  %v324 = vunpack.c.l.b16 %v46
  %v325 = vunpack.c.h.b16 %v46
  %v326 = vunpack.c.l.b16 %v47
  %v327 = vunpack.c.h.b16 %v47
  %v328 = vunpack.c.l.b16 %v48
  %v329 = vunpack.c.h.b16 %v48
  %v330 = vunpack.c.l.b16 %v49
  %v331 = vunpack.c.h.b16 %v49
  %v332 = vunpack.c.l.b16 %v50
  %v333 = vunpack.c.h.b16 %v50
  %v334 = vunpack.c.l.b16 %v51
  %v335 = vunpack.c.h.b16 %v51
  %v336 = vunpack.c.l.b16 %v52
  %v337 = vunpack.c.h.b16 %v52
  %v338 = vunpack.c.l.b16 %v53
  %v339 = vunpack.c.h.b16 %v53
  %v340 = vunpack.c.l.b16 %v54
  %v341 = vunpack.c.h.b16 %v54
  %v342 = vunpack.c.l.b16 %v55
  %v343 = vunpack.c.h.b16 %v55
  %v344 = vunpack.c.l.b16 %v56
  %v345 = vunpack.c.h.b16 %v56
  %v346 = vunpack.c.l.b16 %v57
  %v347 = vunpack.c.h.b16 %v57
  %v348 = vunpack.c.l.b16 %v58
  %v349 = vunpack.c.h.b16 %v58
  %v350 = vunpack.c.l.b16 %v59
  %v351 = vunpack.c.h.b16 %v59
  %v352 = vunpack.c.l.b16 %v60
  %v353 = vunpack.c.h.b16 %v60
  %v354 = vunpack.c.l.b16 %v61
  %v355 = vunpack.c.h.b16 %v61
  %v356 = vunpack.c.l.b16 %v62
  %v357 = vunpack.c.h.b16 %v62
  %v358 = vunpack.c.l.b16 %v63
  %v359 = vunpack.c.h.b16 %v63
  %v360 = vunpack.c.l.b16 %v64
  %v361 = vunpack.c.h.b16 %v64
  %v362 = vunpack.c.l.b16 %v65
  %v363 = vunpack.c.h.b16 %v65
  %v364 = vunpack.c.l.b16 %v66
  %v365 = vunpack.c.h.b16 %v66
  %v366 = vunpack.c.l.b16 %v67
  %v367 = vunpack.c.h.b16 %v67
  %v368 = vunpack.c.l.b16 %v68
  %v369 = vunpack.c.h.b16 %v68
  %v370 = vunpack.c.l.b16 %v69
  %v371 = vunpack.c.h.b16 %v69
  %v372 = vunpack.c.l.b16 %v70
  %v373 = vunpack.c.h.b16 %v70
  %v374 = vunpack.c.l.b16 %v71
  %v375 = vunpack.c.h.b16 %v71
  %v376 = vunpack.c.l.b16 %v72
  %v377 = vunpack.c.h.b16 %v72
  %v378 = vunpack.c.l.b16 %v73
  %v379 = vunpack.c.h.b16 %v73
  %v380 = vunpack.c.l.b16 %v74
  %v381 = vunpack.c.h.b16 %v74
  %v382 = vunpack.c.l.b16 %v75
  %v383 = vunpack.c.h.b16 %v75
  %v384 = vunpack.c.l.b16 %v76
  %v385 = vunpack.c.h.b16 %v76
  %v386 = vunpack.c.l.b16 %v77
  %v387 = vunpack.c.h.b16 %v77
  %v388 = vunpack.c.l.b16 %v78
  %v389 = vunpack.c.h.b16 %v78
  %v390 = vunpack.c.l.b16 %v79
  %v391 = vunpack.c.h.b16 %v79
  %v392 = vunpack.c.l.b16 %v80
  %v393 = vunpack.c.h.b16 %v80
  %v394 = vunpack.c.l.b16 %v81
  %v395 = vunpack.c.h.b16 %v81
  %v396 = vunpack.c.l.b16 %v82
  %v397 = vunpack.c.h.b16 %v82
  %v398 = vunpack.c.l.b16 %v83
  %v399 = vunpack.c.h.b16 %v83
  %v400 = vunpack.c.l.b16 %v84
  %v401 = vunpack.c.h.b16 %v84
  %v402 = vunpack.c.l.b16 %v85
  %v403 = vunpack.c.h.b16 %v85
  %v404 = vunpack.c.l.b16 %v86
  %v405 = vunpack.c.h.b16 %v86
  %v406 = vunpack.c.l.b16 %v87
  %v407 = vunpack.c.h.b16 %v87
  %v408 = vunpack.c.l.b16 %v88
  %v409 = vunpack.c.h.b16 %v88
  %v410 = vunpack.c.l.b16 %v89
  %v411 = vunpack.c.h.b16 %v89
  %v412 = vunpack.c.l.b16 %v90
  %v413 = vunpack.c.h.b16 %v90
  %v414 = vunpack.c.l.b16 %v91
  %v415 = vunpack.c.h.b16 %v91
  %v416 = vunpack.c.l.b16 %v92
  %v417 = vunpack.c.h.b16 %v92
  %v418 = vunpack.c.l.b16 %v93
  %v419 = vunpack.c.h.b16 %v93
  %v420 = vunpack.c.l.b16 %v94
  %v421 = vunpack.c.h.b16 %v94
  %v422 = vunpack.c.l.b16 %v95
  %v423 = vunpack.c.h.b16 %v95
  %v424 = vunpack.c.l.b16 %v96
  %v425 = vunpack.c.h.b16 %v96
  %v426 = vunpack.c.l.b16 %v97
  %v427 = vunpack.c.h.b16 %v97
  %v428 = vunpack.c.l.b16 %v98
  %v429 = vunpack.c.h.b16 %v98
  %v430 = vunpack.c.l.b16 %v99
  %v431 = vunpack.c.h.b16 %v99
  %v432 = vunpack.c.l.b16 %v100
  %v433 = vunpack.c.h.b16 %v100
  %v434 = vunpack.c.l.b16 %v101
  %v435 = vunpack.c.h.b16 %v101
  %v436 = vunpack.c.l.b16 %v102
  %v437 = vunpack.c.h.b16 %v102
  %v438 = vunpack.c.l.b16 %v103
  %v439 = vunpack.c.h.b16 %v103
  %v440 = vunpack.c.l.b16 %v104
  %v441 = vunpack.c.h.b16 %v104
  %v442 = vunpack.c.l.b16 %v105
  %v443 = vunpack.c.h.b16 %v105
  %v444 = vunpack.c.l.b16 %v106
  %v445 = vunpack.c.h.b16 %v106
  %v446 = vunpack.c.l.b16 %v107
  %v447 = vunpack.c.h.b16 %v107
  %v448 = vunpack.c.l.b16 %v108
  %v449 = vunpack.c.h.b16 %v108
  %v450 = vunpack.c.l.b16 %v109
  %v451 = vunpack.c.h.b16 %v109
  %v452 = vunpack.c.l.b16 %v110
  %v453 = vunpack.c.h.b16 %v110
  %v454 = vunpack.c.l.b16 %v111
  %v455 = vunpack.c.h.b16 %v111
  %v456 = vunpack.c.l.b16 %v112
  %v457 = vunpack.c.h.b16 %v112
  %v458 = vunpack.c.l.b16 %v113
  %v459 = vunpack.c.h.b16 %v113
  %v460 = vunpack.c.l.b16 %v114
  %v461 = vunpack.c.h.b16 %v114
  %v462 = vunpack.c.l.b16 %v115
  %v463 = vunpack.c.h.b16 %v115
  %v464 = vunpack.c.l.b16 %v116
  %v465 = vunpack.c.h.b16 %v116
  %v466 = vunpack.c.l.b16 %v117
  %v467 = vunpack.c.h.b16 %v117
  %v468 = vunpack.c.l.b16 %v118
  %v469 = vunpack.c.h.b16 %v118
  %v470 = vunpack.c.l.b16 %v119
  %v471 = vunpack.c.h.b16 %v119
  %v472 = vunpack.c.l.b16 %v120
  %v473 = vunpack.c.h.b16 %v120
  %v474 = vunpack.c.l.b16 %v121
  %v475 = vunpack.c.h.b16 %v121
  %v476 = vunpack.c.l.b16 %v122
  %v477 = vunpack.c.h.b16 %v122
  %v478 = vunpack.c.l.b16 %v123
  %v479 = vunpack.c.h.b16 %v123
  %v480 = vunpack.c.l.b16 %v124
  %v481 = vunpack.c.h.b16 %v124
  %v482 = vunpack.c.l.b16 %v125
  %v483 = vunpack.c.h.b16 %v125
  %v484 = vunpack.c.l.b16 %v126
  %v485 = vunpack.c.h.b16 %v126
  %v486 = vunpack.c.l.b16 %v127
  %v487 = vunpack.c.h.b16 %v127
  %v488 = vunpack.c.l.b16 %v128
  %v489 = vunpack.c.h.b16 %v128
  %v490 = vunpack.c.l.b16 %v129
  %v491 = vunpack.c.h.b16 %v129
  %v492 = vunpack.c.l.b16 %v130
  %v493 = vunpack.c.h.b16 %v130
  %v494 = vunpack.c.l.b16 %v131
  %v495 = vunpack.c.h.b16 %v131
  %v496 = vunpack.c.l.b16 %v132
  %v497 = vunpack.c.h.b16 %v132
  %v498 = vunpack.c.l.b16 %v133
  %v499 = vunpack.c.h.b16 %v133
  %v500 = vunpack.c.l.b16 %v134
  %v501 = vunpack.c.h.b16 %v134
  %v502 = vunpack.c.l.b16 %v135
  %v503 = vunpack.c.h.b16 %v135
  %v504 = vunpack.c.l.b16 %v136
  %v505 = vunpack.c.h.b16 %v136
  %v506 = vunpack.c.l.b16 %v137
  %v507 = vunpack.c.h.b16 %v137
  %v508 = vunpack.c.l.b16 %v138
  %v509 = vunpack.c.h.b16 %v138
  %v510 = vunpack.c.l.b16 %v139
  %v511 = vunpack.c.h.b16 %v139
  %v512 = vunpack.c.l.b16 %v140
  %v513 = vunpack.c.h.b16 %v140
  %v514 = vunpack.c.l.b16 %v141
  %v515 = vunpack.c.h.b16 %v141
  %v516 = vpack.c.b16 %v328, %v324
  %v517 = vpack.c.b16 %v329, %v325
  %v518 = vpack.c.b16 %v330, %v326
  %v519 = vpack.c.b16 %v331, %v327
  %v520 = vpack.c.b16 %v336, %v332
  %v521 = vpack.c.b16 %v337, %v333
  %v522 = vpack.c.b16 %v338, %v334
  %v523 = vpack.c.b16 %v339, %v335
  %v524 = vpack.c.b16 %v344, %v340
  %v525 = vpack.c.b16 %v345, %v341
  %v526 = vpack.c.b16 %v346, %v342
  %v527 = vpack.c.b16 %v347, %v343
  %v528 = vpack.c.b16 %v352, %v348
  %v529 = vpack.c.b16 %v353, %v349
  %v530 = vpack.c.b16 %v354, %v350
  %v531 = vpack.c.b16 %v355, %v351
  %v532 = vpack.c.b16 %v360, %v356
  %v533 = vpack.c.b16 %v361, %v357
  %v534 = vpack.c.b16 %v362, %v358
  %v535 = vpack.c.b16 %v363, %v359
  %v536 = vpack.c.b16 %v368, %v364
  %v537 = vpack.c.b16 %v369, %v365
  %v538 = vpack.c.b16 %v370, %v366
  %v539 = vpack.c.b16 %v371, %v367
  %v540 = vpack.c.b16 %v376, %v372
  %v541 = vpack.c.b16 %v377, %v373
  %v542 = vpack.c.b16 %v378, %v374
  %v543 = vpack.c.b16 %v379, %v375
  %v544 = vpack.c.b16 %v384, %v380
  %v545 = vpack.c.b16 %v385, %v381
  %v546 = vpack.c.b16 %v386, %v382
  %v547 = vpack.c.b16 %v387, %v383
  %v548 = vpack.c.b16 %v392, %v388
  %v549 = vpack.c.b16 %v393, %v389
  %v550 = vpack.c.b16 %v394, %v390
  %v551 = vpack.c.b16 %v395, %v391
  %v552 = vpack.c.b16 %v400, %v396
  %v553 = vpack.c.b16 %v401, %v397
  %v554 = vpack.c.b16 %v402, %v398
  %v555 = vpack.c.b16 %v403, %v399
  %v556 = vpack.c.b16 %v408, %v404
  %v557 = vpack.c.b16 %v409, %v405
  %v558 = vpack.c.b16 %v410, %v406
  %v559 = vpack.c.b16 %v411, %v407
  %v560 = vpack.c.b16 %v416, %v412
  %v561 = vpack.c.b16 %v417, %v413
  %v562 = vpack.c.b16 %v418, %v414
  %v563 = vpack.c.b16 %v419, %v415
  %v564 = vpack.c.b16 %v424, %v420
  %v565 = vpack.c.b16 %v425, %v421
  %v566 = vpack.c.b16 %v426, %v422
  %v567 = vpack.c.b16 %v427, %v423
  %v568 = vpack.c.b16 %v432, %v428
  %v569 = vpack.c.b16 %v433, %v429
  %v570 = vpack.c.b16 %v434, %v430
  %v571 = vpack.c.b16 %v435, %v431
  %v572 = vpack.c.b16 %v440, %v436
  %v573 = vpack.c.b16 %v441, %v437
  %v574 = vpack.c.b16 %v442, %v438
  %v575 = vpack.c.b16 %v443, %v439
  %v576 = vpack.c.b16 %v448, %v444
  %v577 = vpack.c.b16 %v449, %v445
  %v578 = vpack.c.b16 %v450, %v446
  %v579 = vpack.c.b16 %v451, %v447
  %v580 = vpack.c.b16 %v456, %v452
  %v581 = vpack.c.b16 %v457, %v453
  %v582 = vpack.c.b16 %v458, %v454
  %v583 = vpack.c.b16 %v459, %v455
  %v584 = vpack.c.b16 %v464, %v460
  %v585 = vpack.c.b16 %v465, %v461
  %v586 = vpack.c.b16 %v466, %v462
  %v587 = vpack.c.b16 %v467, %v463
  %v588 = vpack.c.b16 %v472, %v468
  %v589 = vpack.c.b16 %v473, %v469
  %v590 = vpack.c.b16 %v474, %v470
  %v591 = vpack.c.b16 %v475, %v471
  %v592 = vpack.c.b16 %v480, %v476
  %v593 = vpack.c.b16 %v481, %v477
  %v594 = vpack.c.b16 %v482, %v478
  %v595 = vpack.c.b16 %v483, %v479
  %v596 = vpack.c.b16 %v488, %v484
  %v597 = vpack.c.b16 %v489, %v485
  %v598 = vpack.c.b16 %v490, %v486
  %v599 = vpack.c.b16 %v491, %v487
  %v600 = vpack.c.b16 %v496, %v492
  %v601 = vpack.c.b16 %v497, %v493
  %v602 = vpack.c.b16 %v498, %v494
  %v603 = vpack.c.b16 %v499, %v495
  %v604 = vpack.c.b16 %v504, %v500
  %v605 = vpack.c.b16 %v505, %v501
  %v606 = vpack.c.b16 %v506, %v502
  %v607 = vpack.c.b16 %v507, %v503
  %v608 = vpack.c.b16 %v512, %v508
  %v609 = vpack.c.b16 %v513, %v509
  %v610 = vpack.c.b16 %v514, %v510
  %v611 = vpack.c.b16 %v515, %v511
  %708 = vmatprep.subr.bf16.mxu0 %v517
  %709 = vmatpush1.bf16.msra.mxu0 %v516
  %710 = vmatprep.subr.bf16.mxu0 %v521
  %711 = vmatpush1.bf16.msra.mxu0 %v520
  %712 = vmatprep.subr.bf16.mxu0 %v525
  %713 = vmatpush1.bf16.msra.mxu0 %v524
  %714 = vmatprep.subr.bf16.mxu0 %v529
  %715 = vmatpush1.bf16.msra.mxu0 %v528
  %716 = vmatprep.subr.bf16.mxu0 %v533
  %717 = vmatpush1.bf16.msra.mxu0 %v532
  %718 = vmatprep.subr.bf16.mxu0 %v537
  %719 = vmatpush1.bf16.msra.mxu0 %v536
  %720 = vmatprep.subr.bf16.mxu0 %v541
  %721 = vmatpush1.bf16.msra.mxu0 %v540
  %722 = vmatprep.subr.bf16.mxu0 %v545
  %723 = vmatpush1.bf16.msra.mxu0 %v544
  %724 = vmatprep.subr.bf16.mxu0 %v549
  %725 = vmatpush1.bf16.msra.mxu0 %v548
  %726 = vmatprep.subr.bf16.mxu0 %v553
  %727 = vmatpush1.bf16.msra.mxu0 %v552
  %728 = vmatprep.subr.bf16.mxu0 %v557
  %729 = vmatpush1.bf16.msra.mxu0 %v556
  %730 = vmatprep.subr.bf16.mxu0 %v561
  %731 = vmatpush1.bf16.msra.mxu0 %v560
  %732 = vmatprep.subr.bf16.mxu0 %v565
  %733 = vmatpush1.bf16.msra.mxu0 %v564
  %734 = vmatprep.subr.bf16.mxu0 %v569
  %735 = vmatpush1.bf16.msra.mxu0 %v568
  %736 = vmatprep.subr.bf16.mxu0 %v573
  %737 = vmatpush1.bf16.msra.mxu0 %v572
  %738 = vmatprep.subr.bf16.mxu0 %v577
  %739 = vmatpush1.bf16.msra.mxu0 %v576
  %740 = vmatprep.mubr.bf16.mxu0 %v205
  %741 = vmatmul.mubr.bf16.gmra.mrb[0].mxu0 %v204
  %v742 = vpop.f32.mrb[0].mxu0
  %v743 = vadd.f32 %v147, %v742
  %v744 = vpop.f32.mrb[0].mxu0
  %v745 = vadd.f32 %v151, %v744
  %v746 = vpop.f32.mrb[0].mxu0
  %v747 = vadd.f32 %v147, %v746
  %v748 = vpop.f32.mrb[0].mxu0
  %v749 = vadd.f32 %v151, %v748
  %750 = vmatprep.mubr.bf16.mxu0 %v208
  %751 = vmatmul.mubr.bf16.gmra.mrb[0].mxu0 %v207
  %v752 = vpop.f32.mrb[0].mxu0
  %v753 = vadd.f32 %v147, %v752
  %v754 = vpop.f32.mrb[0].mxu0
  %v755 = vadd.f32 %v151, %v754
  %v756 = vpop.f32.mrb[0].mxu0
  %v757 = vadd.f32 %v147, %v756
  %v758 = vpop.f32.mrb[0].mxu0
  %v759 = vadd.f32 %v151, %v758
  %760 = vmatprep.mubr.bf16.mxu0 %v211
  %761 = vmatmul.mubr.bf16.gmra.mrb[0].mxu0 %v210
  %v762 = vpop.f32.mrb[0].mxu0
  %v763 = vadd.f32 %v147, %v762
  %v764 = vpop.f32.mrb[0].mxu0
  %v765 = vadd.f32 %v151, %v764
  %v766 = vpop.f32.mrb[0].mxu0
  %v767 = vadd.f32 %v147, %v766
  %v768 = vpop.f32.mrb[0].mxu0
  %v769 = vadd.f32 %v151, %v768
  %770 = vmatprep.mubr.bf16.mxu0 %v214
  %771 = vmatmul.mubr.bf16.gmra.mrb[0].mxu0 %v213
  %v772 = vpop.f32.mrb[0].mxu0
  %v773 = vadd.f32 %v147, %v772
  %v774 = vpop.f32.mrb[0].mxu0
  %v775 = vadd.f32 %v151, %v774
  %v776 = vpop.f32.mrb[0].mxu0
  %v777 = vadd.f32 %v147, %v776
  %v778 = vpop.f32.mrb[0].mxu0
  %v779 = vadd.f32 %v151, %v778
  %780 = vdwg.mxu0
  %781 = vmatprep.subr.bf16.mxu0 %v581
  %782 = vmatpush1.bf16.msra.mxu0 %v580
  %783 = vmatprep.subr.bf16.mxu0 %v585
  %784 = vmatpush1.bf16.msra.mxu0 %v584
  %785 = vmatprep.subr.bf16.mxu0 %v589
  %786 = vmatpush1.bf16.msra.mxu0 %v588
  %787 = vmatprep.subr.bf16.mxu0 %v593
  %788 = vmatpush1.bf16.msra.mxu0 %v592
  %789 = vmatprep.subr.bf16.mxu0 %v597
  %790 = vmatpush1.bf16.msra.mxu0 %v596
  %791 = vmatprep.subr.bf16.mxu0 %v601
  %792 = vmatpush1.bf16.msra.mxu0 %v600
  %793 = vmatprep.subr.bf16.mxu0 %v605
  %794 = vmatpush1.bf16.msra.mxu0 %v604
  %795 = vmatprep.subr.bf16.mxu0 %v609
  %796 = vmatpush1.bf16.msra.mxu0 %v608
  %797 = vmatprep.subr.bf16.mxu0 0
  %798 = vmatpush1.bf16.msra.mxu0 0
  %799 = vmatprep.subr.bf16.mxu0 0
  %800 = vmatpush1.bf16.msra.mxu0 0
  %801 = vmatprep.subr.bf16.mxu0 0
  %802 = vmatpush1.bf16.msra.mxu0 0
  %803 = vmatprep.subr.bf16.mxu0 0
  %804 = vmatpush1.bf16.msra.mxu0 0
  %805 = vmatprep.subr.bf16.mxu0 0
  %806 = vmatpush1.bf16.msra.mxu0 0
  %807 = vmatprep.subr.bf16.mxu0 0
  %808 = vmatpush1.bf16.msra.mxu0 0
  %809 = vmatprep.subr.bf16.mxu0 0
  %810 = vmatpush1.bf16.msra.mxu0 0
  %811 = vmatprep.subr.bf16.mxu0 0
  %812 = vmatpush1.bf16.msra.mxu0 0
  %813 = vmatprep.mubr.bf16.mxu0 0
  %814 = vmatmul.mubr.bf16.gmra.mrb[0].mxu0 %v206
  %v815 = vpop.f32.mrb[0].mxu0
  %v816 = vadd.f32 %v743, %v815
  %v817 = vpop.f32.mrb[0].mxu0
  %v818 = vadd.f32 %v745, %v817
  %v819 = vpop.f32.mrb[0].mxu0
  %v820 = vadd.f32 %v747, %v819
  %v821 = vpop.f32.mrb[0].mxu0
  %v822 = vadd.f32 %v749, %v821
  %823 = vmatprep.mubr.bf16.mxu0 0
  %824 = vmatmul.mubr.bf16.gmra.mrb[0].mxu0 %v209
  %v825 = vpop.f32.mrb[0].mxu0
  %v826 = vadd.f32 %v753, %v825
  %v827 = vpop.f32.mrb[0].mxu0
  %v828 = vadd.f32 %v755, %v827
  %v829 = vpop.f32.mrb[0].mxu0
  %v830 = vadd.f32 %v757, %v829
  %v831 = vpop.f32.mrb[0].mxu0
  %v832 = vadd.f32 %v759, %v831
  %833 = vmatprep.mubr.bf16.mxu0 0
  %834 = vmatmul.mubr.bf16.gmra.mrb[0].mxu0 %v212
  %v835 = vpop.f32.mrb[0].mxu0
  %v836 = vadd.f32 %v763, %v835
  %v837 = vpop.f32.mrb[0].mxu0
  %v838 = vadd.f32 %v765, %v837
  %v839 = vpop.f32.mrb[0].mxu0
  %v840 = vadd.f32 %v767, %v839
  %v841 = vpop.f32.mrb[0].mxu0
  %v842 = vadd.f32 %v769, %v841
  %843 = vmatprep.mubr.bf16.mxu0 0
  %844 = vmatmul.mubr.bf16.gmra.mrb[0].mxu0 %v215
  %v845 = vpop.f32.mrb[0].mxu0
  %v846 = vadd.f32 %v773, %v845
  %v847 = vpop.f32.mrb[0].mxu0
  %v848 = vadd.f32 %v775, %v847
  %v849 = vpop.f32.mrb[0].mxu0
  %v850 = vadd.f32 %v777, %v849
  %v851 = vpop.f32.mrb[0].mxu0
  %v852 = vadd.f32 %v779, %v851
  %853 = vdwg.mxu0
  %854 = vmatprep.subr.bf16.mxu0 %v519
  %855 = vmatpush1.bf16.msra.mxu0 %v518
  %856 = vmatprep.subr.bf16.mxu0 %v523
  %857 = vmatpush1.bf16.msra.mxu0 %v522
  %858 = vmatprep.subr.bf16.mxu0 %v527
  %859 = vmatpush1.bf16.msra.mxu0 %v526
  %860 = vmatprep.subr.bf16.mxu0 %v531
  %861 = vmatpush1.bf16.msra.mxu0 %v530
  %862 = vmatprep.subr.bf16.mxu0 %v535
  %863 = vmatpush1.bf16.msra.mxu0 %v534
  %864 = vmatprep.subr.bf16.mxu0 %v539
  %865 = vmatpush1.bf16.msra.mxu0 %v538
  %866 = vmatprep.subr.bf16.mxu0 %v543
  %867 = vmatpush1.bf16.msra.mxu0 %v542
  %868 = vmatprep.subr.bf16.mxu0 %v547
  %869 = vmatpush1.bf16.msra.mxu0 %v546
  %870 = vmatprep.subr.bf16.mxu0 %v551
  %871 = vmatpush1.bf16.msra.mxu0 %v550
  %872 = vmatprep.subr.bf16.mxu0 %v555
  %873 = vmatpush1.bf16.msra.mxu0 %v554
  %874 = vmatprep.subr.bf16.mxu0 %v559
  %875 = vmatpush1.bf16.msra.mxu0 %v558
  %876 = vmatprep.subr.bf16.mxu0 %v563
  %877 = vmatpush1.bf16.msra.mxu0 %v562
  %878 = vmatprep.subr.bf16.mxu0 %v567
  %879 = vmatpush1.bf16.msra.mxu0 %v566
  %880 = vmatprep.subr.bf16.mxu0 %v571
  %881 = vmatpush1.bf16.msra.mxu0 %v570
  %882 = vmatprep.subr.bf16.mxu0 %v575
  %883 = vmatpush1.bf16.msra.mxu0 %v574
  %884 = vmatprep.subr.bf16.mxu0 %v579
  %885 = vmatpush1.bf16.msra.mxu0 %v578
  %886 = vmatprep.mubr.bf16.mxu0 %v205
  %887 = vmatmul.mubr.bf16.gmra.mrb[0].mxu0 %v204
  %v888 = vpop.f32.mrb[0].mxu0
  %v889 = vadd.f32 %v155, %v888
  %v890 = vpop.f32.mrb[0].mxu0
  %v891 = vadd.f32 %v159, %v890
  %v892 = vpop.f32.mrb[0].mxu0
  %v893 = vadd.f32 %v155, %v892
  %v894 = vpop.f32.mrb[0].mxu0
  %v895 = vadd.f32 %v159, %v894
  %896 = vmatprep.mubr.bf16.mxu0 %v208
  %897 = vmatmul.mubr.bf16.gmra.mrb[0].mxu0 %v207
  %v898 = vpop.f32.mrb[0].mxu0
  %v899 = vadd.f32 %v155, %v898
  %v900 = vpop.f32.mrb[0].mxu0
  %v901 = vadd.f32 %v159, %v900
  %v902 = vpop.f32.mrb[0].mxu0
  %v903 = vadd.f32 %v155, %v902
  %v904 = vpop.f32.mrb[0].mxu0
  %v905 = vadd.f32 %v159, %v904
  %906 = vmatprep.mubr.bf16.mxu0 %v211
  %907 = vmatmul.mubr.bf16.gmra.mrb[0].mxu0 %v210
  %v908 = vpop.f32.mrb[0].mxu0
  %v909 = vadd.f32 %v155, %v908
  %v910 = vpop.f32.mrb[0].mxu0
  %v911 = vadd.f32 %v159, %v910
  %v912 = vpop.f32.mrb[0].mxu0
  %v913 = vadd.f32 %v155, %v912
  %v914 = vpop.f32.mrb[0].mxu0
  %v915 = vadd.f32 %v159, %v914
  %916 = vmatprep.mubr.bf16.mxu0 %v214
  %917 = vmatmul.mubr.bf16.gmra.mrb[0].mxu0 %v213
  %v918 = vpop.f32.mrb[0].mxu0
  %v919 = vadd.f32 %v155, %v918
  %v920 = vpop.f32.mrb[0].mxu0
  %v921 = vadd.f32 %v159, %v920
  %v922 = vpop.f32.mrb[0].mxu0
  %v923 = vadd.f32 %v155, %v922
  %v924 = vpop.f32.mrb[0].mxu0
  %v925 = vadd.f32 %v159, %v924
  %926 = vdwg.mxu0
  %927 = vmatprep.subr.bf16.mxu0 %v583
  %928 = vmatpush1.bf16.msra.mxu0 %v582
  %929 = vmatprep.subr.bf16.mxu0 %v587
  %930 = vmatpush1.bf16.msra.mxu0 %v586
  %931 = vmatprep.subr.bf16.mxu0 %v591
  %932 = vmatpush1.bf16.msra.mxu0 %v590
  %933 = vmatprep.subr.bf16.mxu0 %v595
  %934 = vmatpush1.bf16.msra.mxu0 %v594
  %935 = vmatprep.subr.bf16.mxu0 %v599
  %936 = vmatpush1.bf16.msra.mxu0 %v598
  %937 = vmatprep.subr.bf16.mxu0 %v603
  %938 = vmatpush1.bf16.msra.mxu0 %v602
  %939 = vmatprep.subr.bf16.mxu0 %v607
  %940 = vmatpush1.bf16.msra.mxu0 %v606
  %941 = vmatprep.subr.bf16.mxu0 %v611
  %942 = vmatpush1.bf16.msra.mxu0 %v610
  %943 = vmatprep.subr.bf16.mxu0 0
  %944 = vmatpush1.bf16.msra.mxu0 0
  %945 = vmatprep.subr.bf16.mxu0 0
  %946 = vmatpush1.bf16.msra.mxu0 0
  %947 = vmatprep.subr.bf16.mxu0 0
  %948 = vmatpush1.bf16.msra.mxu0 0
  %949 = vmatprep.subr.bf16.mxu0 0
  %950 = vmatpush1.bf16.msra.mxu0 0
  %951 = vmatprep.subr.bf16.mxu0 0
  %952 = vmatpush1.bf16.msra.mxu0 0
  %953 = vmatprep.subr.bf16.mxu0 0
  %954 = vmatpush1.bf16.msra.mxu0 0
  %955 = vmatprep.subr.bf16.mxu0 0
  %956 = vmatpush1.bf16.msra.mxu0 0
  %957 = vmatprep.subr.bf16.mxu0 0
  %958 = vmatpush1.bf16.msra.mxu0 0
  %959 = vmatprep.mubr.bf16.mxu0 0
  %960 = vmatmul.mubr.bf16.gmra.mrb[0].mxu0 %v206
  %v961 = vpop.f32.mrb[0].mxu0
  %v962 = vadd.f32 %v889, %v961
  %v963 = vpop.f32.mrb[0].mxu0
  %v964 = vadd.f32 %v891, %v963
  %v965 = vpop.f32.mrb[0].mxu0
  %v966 = vadd.f32 %v893, %v965
  %v967 = vpop.f32.mrb[0].mxu0
  %v968 = vadd.f32 %v895, %v967
  %969 = vmatprep.mubr.bf16.mxu0 0
  %970 = vmatmul.mubr.bf16.gmra.mrb[0].mxu0 %v209
  %v971 = vpop.f32.mrb[0].mxu0
  %v972 = vadd.f32 %v899, %v971
  %v973 = vpop.f32.mrb[0].mxu0
  %v974 = vadd.f32 %v901, %v973
  %v975 = vpop.f32.mrb[0].mxu0
  %v976 = vadd.f32 %v903, %v975
  %v977 = vpop.f32.mrb[0].mxu0
  %v978 = vadd.f32 %v905, %v977
  %979 = vmatprep.mubr.bf16.mxu0 0
  %980 = vmatmul.mubr.bf16.gmra.mrb[0].mxu0 %v212
  %v981 = vpop.f32.mrb[0].mxu0
  %v982 = vadd.f32 %v909, %v981
  %v983 = vpop.f32.mrb[0].mxu0
  %v984 = vadd.f32 %v911, %v983
  %v985 = vpop.f32.mrb[0].mxu0
  %v986 = vadd.f32 %v913, %v985
  %v987 = vpop.f32.mrb[0].mxu0
  %v988 = vadd.f32 %v915, %v987
  %989 = vmatprep.mubr.bf16.mxu0 0
  %990 = vmatmul.mubr.bf16.gmra.mrb[0].mxu0 %v215
  %v991 = vpop.f32.mrb[0].mxu0
  %v992 = vadd.f32 %v919, %v991
  %v993 = vpop.f32.mrb[0].mxu0
  %v994 = vadd.f32 %v921, %v993
  %v995 = vpop.f32.mrb[0].mxu0
  %v996 = vadd.f32 %v923, %v995
  %v997 = vpop.f32.mrb[0].mxu0
  %v998 = vadd.f32 %v925, %v997
  %999 = vdwg.mxu0
  %1000 = vst [vmem:[#allocation4] sm:$0xff] %v816
  %1001 = vst [vmem:[#allocation4 + $0x8] sm:$0xff] %v818
  %1002 = vst [vmem:[#allocation4 + $0x10] sm:$0xff] %v962
  %1003 = vst [vmem:[#allocation4 + $0x18] sm:$0xff] %v964
  %1004 = vst [vmem:[#allocation4 + $0x20] sm:$0xff] %v820
  %1005 = vst [vmem:[#allocation4 + $0x28] sm:$0xff] %v822
  %1006 = vst [vmem:[#allocation4 + $0x30] sm:$0xff] %v966
  %1007 = vst [vmem:[#allocation4 + $0x38] sm:$0xff] %v968
  %1008 = vst [vmem:[#allocation4 + $0x40] sm:$0xff] %v826
  %1009 = vst [vmem:[#allocation4 + $0x48] sm:$0xff] %v828
  %1010 = vst [vmem:[#allocation4 + $0x50] sm:$0xff] %v972
  %1011 = vst [vmem:[#allocation4 + $0x58] sm:$0xff] %v974
  %1012 = vst [vmem:[#allocation4 + $0x60] sm:$0xff] %v830
  %1013 = vst [vmem:[#allocation4 + $0x68] sm:$0xff] %v832
  %1014 = vst [vmem:[#allocation4 + $0x70] sm:$0xff] %v976
  %1015 = vst [vmem:[#allocation4 + $0x78] sm:$0xff] %v978
  %1016 = vst [vmem:[#allocation4 + $0x80] sm:$0xff] %v836
  %1017 = vst [vmem:[#allocation4 + $0x88] sm:$0xff] %v838
  %1018 = vst [vmem:[#allocation4 + $0x90] sm:$0xff] %v982
  %1019 = vst [vmem:[#allocation4 + $0x98] sm:$0xff] %v984
  %1020 = vst [vmem:[#allocation4 + $0xa0] sm:$0xff] %v840
  %1021 = vst [vmem:[#allocation4 + $0xa8] sm:$0xff] %v842
  %1022 = vst [vmem:[#allocation4 + $0xb0] sm:$0xff] %v986
  %1023 = vst [vmem:[#allocation4 + $0xb8] sm:$0xff] %v988
  %1024 = vst [vmem:[#allocation4 + $0xc0] sm:$0xff] %v846
  %1025 = vst [vmem:[#allocation4 + $0xc8] sm:$0xff] %v848
  %1026 = vst [vmem:[#allocation4 + $0xd0] sm:$0xff] %v992
  %1027 = vst [vmem:[#allocation4 + $0xd8] sm:$0xff] %v994
  %1028 = vst [vmem:[#allocation4 + $0xe0] sm:$0xff] %v850
  %1029 = vst [vmem:[#allocation4 + $0xe8] sm:$0xff] %v852
  %1030 = vst [vmem:[#allocation4 + $0xf0] sm:$0xff] %v996
  %1031 = vst [vmem:[#allocation4 + $0xf8] sm:$0xff] %v998
  %v1032 = vld [vmem:[%s3] sm:$0xff]
  %v1033 = vld [vmem:[%s3 + $0x8] sm:$0xff]
  %v1034 = vld [vmem:[%s3 + $0x10] sm:$0xff]
  %v1035 = vld [vmem:[%s3 + $0x18] sm:$0xff]
  %v1036 = vld [vmem:[%s3 + $0x20] sm:$0xff]
  %v1037 = vld [vmem:[%s3 + $0x28] sm:$0xff]
  %v1038 = vld [vmem:[%s3 + $0x30] sm:$0xff]
  %v1039 = vld [vmem:[%s3 + $0x38] sm:$0xff]
  %v1040 = vld [vmem:[%s3 + $0x40] sm:$0xff]
  %v1041 = vld [vmem:[%s3 + $0x48] sm:$0xff]
  %v1042 = vld [vmem:[%s3 + $0x50] sm:$0xff]
  %v1043 = vld [vmem:[%s3 + $0x58] sm:$0xff]
  %v1044 = vld [vmem:[%s3 + $0x60] sm:$0xff]
  %v1045 = vld [vmem:[%s3 + $0x68] sm:$0xff]
  %v1046 = vld [vmem:[%s3 + $0x70] sm:$0xff]
  %v1047 = vld [vmem:[%s3 + $0x78] sm:$0xff]
  %v1048 = vld [vmem:[%s3 + $0x80] sm:$0xff]
  %v1049 = vld [vmem:[%s3 + $0x88] sm:$0xff]
  %v1050 = vld [vmem:[%s3 + $0x90] sm:$0xff]
  %v1051 = vld [vmem:[%s3 + $0x98] sm:$0xff]
  %v1052 = vld [vmem:[%s3 + $0xa0] sm:$0xff]
  %v1053 = vld [vmem:[%s3 + $0xa8] sm:$0xff]
  %v1054 = vld [vmem:[%s3 + $0xb0] sm:$0xff]
  %v1055 = vld [vmem:[%s3 + $0xb8] sm:$0xff]
  %v1056 = vld [vmem:[%s3 + $0xc0] sm:$0xff]
  %v1057 = vld [vmem:[%s3 + $0xc8] sm:$0xff]
  %v1058 = vld [vmem:[%s3 + $0xd0] sm:$0xff]
  %v1059 = vld [vmem:[%s3 + $0xd8] sm:$0xff]
  %v1060 = vld [vmem:[%s3 + $0xe0] sm:$0xff]
  %v1061 = vld [vmem:[%s3 + $0xe8] sm:$0xff]
  %v1062 = vld [vmem:[%s3 + $0xf0] sm:$0xff]
  %v1063 = vld [vmem:[%s3 + $0xf8] sm:$0xff]
  %v1064 = vld [vmem:[#allocation2] sm:$0xff]
  %v1065 = vld [vmem:[#allocation3] sm:$0xff]
  %v1066 = vld [vmem:[#allocation4] sm:$0xff]
  %v1067 = vld [vmem:[#allocation4 + $0x8] sm:$0xff]
  %v1068 = vld [vmem:[#allocation4 + $0x10] sm:$0xff]
  %v1069 = vld [vmem:[#allocation4 + $0x18] sm:$0xff]
  %v1070 = vpack.c.bf16 %v1064, %v1064
  %v1103 = vunpack.c.l.b16 %v1032
  %v1104 = vunpack.c.h.b16 %v1032
  %v1105 = vunpack.c.l.b16 %v1033
  %v1106 = vunpack.c.h.b16 %v1033
  %v1107 = vunpack.c.l.b16 %v1034
  %v1108 = vunpack.c.h.b16 %v1034
  %v1109 = vunpack.c.l.b16 %v1035
  %v1110 = vunpack.c.h.b16 %v1035
  %v1111 = vunpack.c.l.b16 %v1036
  %v1112 = vunpack.c.h.b16 %v1036
  %v1113 = vunpack.c.l.b16 %v1037
  %v1114 = vunpack.c.h.b16 %v1037
  %v1115 = vunpack.c.l.b16 %v1038
  %v1116 = vunpack.c.h.b16 %v1038
  %v1117 = vunpack.c.l.b16 %v1039
  %v1118 = vunpack.c.h.b16 %v1039
  %v1119 = vunpack.c.l.b16 %v1040
  %v1120 = vunpack.c.h.b16 %v1040
  %v1121 = vunpack.c.l.b16 %v1041
  %v1122 = vunpack.c.h.b16 %v1041
  %v1123 = vunpack.c.l.b16 %v1042
  %v1124 = vunpack.c.h.b16 %v1042
  %v1125 = vunpack.c.l.b16 %v1043
  %v1126 = vunpack.c.h.b16 %v1043
  %v1127 = vunpack.c.l.b16 %v1044
  %v1128 = vunpack.c.h.b16 %v1044
  %v1129 = vunpack.c.l.b16 %v1045
  %v1130 = vunpack.c.h.b16 %v1045
  %v1131 = vunpack.c.l.b16 %v1046
  %v1132 = vunpack.c.h.b16 %v1046
  %v1133 = vunpack.c.l.b16 %v1047
  %v1134 = vunpack.c.h.b16 %v1047
  %v1135 = vunpack.c.l.b16 %v1048
  %v1136 = vunpack.c.h.b16 %v1048
  %v1137 = vunpack.c.l.b16 %v1049
  %v1138 = vunpack.c.h.b16 %v1049
  %v1139 = vunpack.c.l.b16 %v1050
  %v1140 = vunpack.c.h.b16 %v1050
  %v1141 = vunpack.c.l.b16 %v1051
  %v1142 = vunpack.c.h.b16 %v1051
  %v1143 = vunpack.c.l.b16 %v1052
  %v1144 = vunpack.c.h.b16 %v1052
  %v1145 = vunpack.c.l.b16 %v1053
  %v1146 = vunpack.c.h.b16 %v1053
  %v1147 = vunpack.c.l.b16 %v1054
  %v1148 = vunpack.c.h.b16 %v1054
  %v1149 = vunpack.c.l.b16 %v1055
  %v1150 = vunpack.c.h.b16 %v1055
  %v1151 = vunpack.c.l.b16 %v1056
  %v1152 = vunpack.c.h.b16 %v1056
  %v1153 = vunpack.c.l.b16 %v1057
  %v1154 = vunpack.c.h.b16 %v1057
  %v1155 = vunpack.c.l.b16 %v1058
  %v1156 = vunpack.c.h.b16 %v1058
  %v1157 = vunpack.c.l.b16 %v1059
  %v1158 = vunpack.c.h.b16 %v1059
  %v1159 = vunpack.c.l.b16 %v1060
  %v1160 = vunpack.c.h.b16 %v1060
  %v1161 = vunpack.c.l.b16 %v1061
  %v1162 = vunpack.c.h.b16 %v1061
  %v1163 = vunpack.c.l.b16 %v1062
  %v1164 = vunpack.c.h.b16 %v1062
  %v1165 = vunpack.c.l.b16 %v1063
  %v1166 = vunpack.c.h.b16 %v1063
  %v1167 = vpack.c.b16 %v1107, %v1103
  %v1168 = vpack.c.b16 %v1108, %v1104
  %v1169 = vpack.c.b16 %v1109, %v1105
  %v1170 = vpack.c.b16 %v1110, %v1106
  %v1171 = vpack.c.b16 %v1115, %v1111
  %v1172 = vpack.c.b16 %v1116, %v1112
  %v1173 = vpack.c.b16 %v1117, %v1113
  %v1174 = vpack.c.b16 %v1118, %v1114
  %v1175 = vpack.c.b16 %v1123, %v1119
  %v1176 = vpack.c.b16 %v1124, %v1120
  %v1177 = vpack.c.b16 %v1125, %v1121
  %v1178 = vpack.c.b16 %v1126, %v1122
  %v1179 = vpack.c.b16 %v1131, %v1127
  %v1180 = vpack.c.b16 %v1132, %v1128
  %v1181 = vpack.c.b16 %v1133, %v1129
  %v1182 = vpack.c.b16 %v1134, %v1130
  %v1183 = vpack.c.b16 %v1139, %v1135
  %v1184 = vpack.c.b16 %v1140, %v1136
  %v1185 = vpack.c.b16 %v1141, %v1137
  %v1186 = vpack.c.b16 %v1142, %v1138
  %v1187 = vpack.c.b16 %v1147, %v1143
  %v1188 = vpack.c.b16 %v1148, %v1144
  %v1189 = vpack.c.b16 %v1149, %v1145
  %v1190 = vpack.c.b16 %v1150, %v1146
  %v1191 = vpack.c.b16 %v1155, %v1151
  %v1192 = vpack.c.b16 %v1156, %v1152
  %v1193 = vpack.c.b16 %v1157, %v1153
  %v1194 = vpack.c.b16 %v1158, %v1154
  %v1195 = vpack.c.b16 %v1163, %v1159
  %v1196 = vpack.c.b16 %v1164, %v1160
  %v1197 = vpack.c.b16 %v1165, %v1161
  %v1198 = vpack.c.b16 %v1166, %v1162
  %1231 = vmatprep.subr.bf16.mxu0 %v1168
  %1232 = vmatpush1.bf16.msra.mxu0 %v1167
  %1233 = vmatprep.subr.bf16.mxu0 %v1172
  %1234 = vmatpush1.bf16.msra.mxu0 %v1171
  %1235 = vmatprep.subr.bf16.mxu0 %v1176
  %1236 = vmatpush1.bf16.msra.mxu0 %v1175
  %1237 = vmatprep.subr.bf16.mxu0 %v1180
  %1238 = vmatpush1.bf16.msra.mxu0 %v1179
  %1239 = vmatprep.subr.bf16.mxu0 %v1184
  %1240 = vmatpush1.bf16.msra.mxu0 %v1183
  %1241 = vmatprep.subr.bf16.mxu0 %v1188
  %1242 = vmatpush1.bf16.msra.mxu0 %v1187
  %1243 = vmatprep.subr.bf16.mxu0 %v1192
  %1244 = vmatpush1.bf16.msra.mxu0 %v1191
  %1245 = vmatprep.subr.bf16.mxu0 %v1196
  %1246 = vmatpush1.bf16.msra.mxu0 %v1195
  %1247 = vmatprep.subr.bf16.mxu0 0
  %1248 = vmatpush1.bf16.msra.mxu0 0
  %1249 = vmatprep.subr.bf16.mxu0 0
  %1250 = vmatpush1.bf16.msra.mxu0 0
  %1251 = vmatprep.subr.bf16.mxu0 0
  %1252 = vmatpush1.bf16.msra.mxu0 0
  %1253 = vmatprep.subr.bf16.mxu0 0
  %1254 = vmatpush1.bf16.msra.mxu0 0
  %1255 = vmatprep.subr.bf16.mxu0 0
  %1256 = vmatpush1.bf16.msra.mxu0 0
  %1257 = vmatprep.subr.bf16.mxu0 0
  %1258 = vmatpush1.bf16.msra.mxu0 0
  %1259 = vmatprep.subr.bf16.mxu0 0
  %1260 = vmatpush1.bf16.msra.mxu0 0
  %1261 = vmatprep.subr.bf16.mxu0 0
  %1262 = vmatpush1.bf16.msra.mxu0 0
  %1263 = vmatprep.mubr.bf16.mxu0 0
  %1264 = vmatmul.mubr.bf16.gmra.mrb[0].mxu0 %v1070
  %v1265 = vpop.f32.mrb[0].mxu0
  %v1266 = vadd.f32 0.0, %v1265
  %v1267 = vpop.f32.mrb[0].mxu0
  %v1268 = vadd.f32 0.0, %v1267
  %v1269 = vpop.f32.mrb[0].mxu0
  %v1270 = vpop.f32.mrb[0].mxu0
  %1271 = vdwg.mxu0
  %1272 = vmatprep.subr.bf16.mxu0 %v1170
  %1273 = vmatpush1.bf16.msra.mxu0 %v1169
  %1274 = vmatprep.subr.bf16.mxu0 %v1174
  %1275 = vmatpush1.bf16.msra.mxu0 %v1173
  %1276 = vmatprep.subr.bf16.mxu0 %v1178
  %1277 = vmatpush1.bf16.msra.mxu0 %v1177
  %1278 = vmatprep.subr.bf16.mxu0 %v1182
  %1279 = vmatpush1.bf16.msra.mxu0 %v1181
  %1280 = vmatprep.subr.bf16.mxu0 %v1186
  %1281 = vmatpush1.bf16.msra.mxu0 %v1185
  %1282 = vmatprep.subr.bf16.mxu0 %v1190
  %1283 = vmatpush1.bf16.msra.mxu0 %v1189
  %1284 = vmatprep.subr.bf16.mxu0 %v1194
  %1285 = vmatpush1.bf16.msra.mxu0 %v1193
  %1286 = vmatprep.subr.bf16.mxu0 %v1198
  %1287 = vmatpush1.bf16.msra.mxu0 %v1197
  %1288 = vmatprep.subr.bf16.mxu0 0
  %1289 = vmatpush1.bf16.msra.mxu0 0
  %1290 = vmatprep.subr.bf16.mxu0 0
  %1291 = vmatpush1.bf16.msra.mxu0 0
  %1292 = vmatprep.subr.bf16.mxu0 0
  %1293 = vmatpush1.bf16.msra.mxu0 0
  %1294 = vmatprep.subr.bf16.mxu0 0
  %1295 = vmatpush1.bf16.msra.mxu0 0
  %1296 = vmatprep.subr.bf16.mxu0 0
  %1297 = vmatpush1.bf16.msra.mxu0 0
  %1298 = vmatprep.subr.bf16.mxu0 0
  %1299 = vmatpush1.bf16.msra.mxu0 0
  %1300 = vmatprep.subr.bf16.mxu0 0
  %1301 = vmatpush1.bf16.msra.mxu0 0
  %1302 = vmatprep.subr.bf16.mxu0 0
  %1303 = vmatpush1.bf16.msra.mxu0 0
  %1304 = vmatprep.mubr.bf16.mxu0 0
  %1305 = vmatmul.mubr.bf16.gmra.mrb[0].mxu0 %v1070
  %v1306 = vpop.f32.mrb[0].mxu0
  %v1307 = vadd.f32 0.0, %v1306
  %v1308 = vpop.f32.mrb[0].mxu0
  %v1309 = vadd.f32 0.0, %v1308
  %v1310 = vpop.f32.mrb[0].mxu0
  %v1311 = vpop.f32.mrb[0].mxu0
  %1312 = vdwg.mxu0
  %v1313 = vadd.f32 %v1066, %v1266
  %v1314 = vadd.f32 %v1067, %v1268
  %v1315 = vadd.f32 %v1068, %v1307
  %v1316 = vadd.f32 %v1069, %v1309
  %v1317 = vmul.f32 %v1313, 0.5
  %v1318 = vtanh.pop %v1317
  %v1319 = vadd.f32 %v1318, 1.0
  %v1320 = vmul.f32 %v1319, 0.5
  %v1321 = vmul.f32 %v1314, 0.5
  %v1322 = vtanh.pop %v1321
  %v1323 = vadd.f32 %v1322, 1.0
  %v1324 = vmul.f32 %v1323, 0.5
  %v1325 = vtanh.pop %v1315
  %v1326 = vmul.f32 %v1316, 0.5
  %v1327 = vtanh.pop %v1326
  %v1328 = vadd.f32 %v1327, 1.0
  %v1329 = vmul.f32 %v1328, 0.5
  %v1330 = vmul.f32 %v1324, %v1065
  %v1331 = vmul.f32 %v1320, %v1325
  %v1332 = vadd.f32 %v1330, %v1331
  %v1333 = vtanh.pop %v1332
  %v1334 = vmul.f32 %v1329, %v1333
  %s1335 = scalar_lea.vmem [#allocation4], 32
  %v1336 = vld [vmem:[%s1335] sm:$0xff]
  %v1337 = vld [vmem:[%s1335 + $0x8] sm:$0xff]
  %v1338 = vld [vmem:[%s1335 + $0x10] sm:$0xff]
  %v1339 = vld [vmem:[%s1335 + $0x18] sm:$0xff]
  %v1340 = vpack.c.bf16 %v1334, %v1334
  %1341 = vmatprep.subr.bf16.mxu0 %v1168
  %1342 = vmatpush1.bf16.msra.mxu0 %v1167
  %1343 = vmatprep.subr.bf16.mxu0 %v1172
  %1344 = vmatpush1.bf16.msra.mxu0 %v1171
  %1345 = vmatprep.subr.bf16.mxu0 %v1176
  %1346 = vmatpush1.bf16.msra.mxu0 %v1175
  %1347 = vmatprep.subr.bf16.mxu0 %v1180
  %1348 = vmatpush1.bf16.msra.mxu0 %v1179
  %1349 = vmatprep.subr.bf16.mxu0 %v1184
  %1350 = vmatpush1.bf16.msra.mxu0 %v1183
  %1351 = vmatprep.subr.bf16.mxu0 %v1188
  %1352 = vmatpush1.bf16.msra.mxu0 %v1187
  %1353 = vmatprep.subr.bf16.mxu0 %v1192
  %1354 = vmatpush1.bf16.msra.mxu0 %v1191
  %1355 = vmatprep.subr.bf16.mxu0 %v1196
  %1356 = vmatpush1.bf16.msra.mxu0 %v1195
  %1357 = vmatprep.subr.bf16.mxu0 0
  %1358 = vmatpush1.bf16.msra.mxu0 0
  %1359 = vmatprep.subr.bf16.mxu0 0
  %1360 = vmatpush1.bf16.msra.mxu0 0
  %1361 = vmatprep.subr.bf16.mxu0 0
  %1362 = vmatpush1.bf16.msra.mxu0 0
  %1363 = vmatprep.subr.bf16.mxu0 0
  %1364 = vmatpush1.bf16.msra.mxu0 0
  %1365 = vmatprep.subr.bf16.mxu0 0
  %1366 = vmatpush1.bf16.msra.mxu0 0
  %1367 = vmatprep.subr.bf16.mxu0 0
  %1368 = vmatpush1.bf16.msra.mxu0 0
  %1369 = vmatprep.subr.bf16.mxu0 0
  %1370 = vmatpush1.bf16.msra.mxu0 0
  %1371 = vmatprep.subr.bf16.mxu0 0
  %1372 = vmatpush1.bf16.msra.mxu0 0
  %1373 = vmatprep.mubr.bf16.mxu0 0
  %1374 = vmatmul.mubr.bf16.gmra.mrb[0].mxu0 %v1340
  %v1375 = vpop.f32.mrb[0].mxu0
  %v1376 = vadd.f32 0.0, %v1375
  %v1377 = vpop.f32.mrb[0].mxu0
  %v1378 = vadd.f32 0.0, %v1377
  %v1379 = vpop.f32.mrb[0].mxu0
  %v1380 = vpop.f32.mrb[0].mxu0
  %1381 = vdwg.mxu0
  %1382 = vmatprep.subr.bf16.mxu0 %v1170
  %1383 = vmatpush1.bf16.msra.mxu0 %v1169
  %1384 = vmatprep.subr.bf16.mxu0 %v1174
  %1385 = vmatpush1.bf16.msra.mxu0 %v1173
  %1386 = vmatprep.subr.bf16.mxu0 %v1178
  %1387 = vmatpush1.bf16.msra.mxu0 %v1177
  %1388 = vmatprep.subr.bf16.mxu0 %v1182
  %1389 = vmatpush1.bf16.msra.mxu0 %v1181
  %1390 = vmatprep.subr.bf16.mxu0 %v1186
  %1391 = vmatpush1.bf16.msra.mxu0 %v1185
  %1392 = vmatprep.subr.bf16.mxu0 %v1190
  %1393 = vmatpush1.bf16.msra.mxu0 %v1189
  %1394 = vmatprep.subr.bf16.mxu0 %v1194
  %1395 = vmatpush1.bf16.msra.mxu0 %v1193
  %1396 = vmatprep.subr.bf16.mxu0 %v1198
  %1397 = vmatpush1.bf16.msra.mxu0 %v1197
  %1398 = vmatprep.subr.bf16.mxu0 0
  %1399 = vmatpush1.bf16.msra.mxu0 0
  %1400 = vmatprep.subr.bf16.mxu0 0
  %1401 = vmatpush1.bf16.msra.mxu0 0
  %1402 = vmatprep.subr.bf16.mxu0 0
  %1403 = vmatpush1.bf16.msra.mxu0 0
  %1404 = vmatprep.subr.bf16.mxu0 0
  %1405 = vmatpush1.bf16.msra.mxu0 0
  %1406 = vmatprep.subr.bf16.mxu0 0
  %1407 = vmatpush1.bf16.msra.mxu0 0
  %1408 = vmatprep.subr.bf16.mxu0 0
  %1409 = vmatpush1.bf16.msra.mxu0 0
  %1410 = vmatprep.subr.bf16.mxu0 0
  %1411 = vmatpush1.bf16.msra.mxu0 0
  %1412 = vmatprep.subr.bf16.mxu0 0
  %1413 = vmatpush1.bf16.msra.mxu0 0
  %1414 = vmatprep.mubr.bf16.mxu0 0
  %1415 = vmatmul.mubr.bf16.gmra.mrb[0].mxu0 %v1340
  %v1416 = vpop.f32.mrb[0].mxu0
  %v1417 = vadd.f32 0.0, %v1416
  %v1418 = vpop.f32.mrb[0].mxu0
  %v1419 = vadd.f32 0.0, %v1418
  %v1420 = vpop.f32.mrb[0].mxu0
  %v1421 = vpop.f32.mrb[0].mxu0
  %1422 = vdwg.mxu0
  %v1423 = vadd.f32 %v1336, %v1376
  %v1424 = vadd.f32 %v1337, %v1378
  %v1425 = vadd.f32 %v1338, %v1417
  %v1426 = vadd.f32 %v1339, %v1419
  %v1427 = vmul.f32 %v1423, 0.5
  %v1428 = vtanh.pop %v1427
  %v1429 = vadd.f32 %v1428, 1.0
  %v1430 = vmul.f32 %v1429, 0.5
  %v1431 = vmul.f32 %v1424, 0.5
  %v1432 = vtanh.pop %v1431
  %v1433 = vadd.f32 %v1432, 1.0
  %v1434 = vmul.f32 %v1433, 0.5
  %v1435 = vtanh.pop %v1425
  %v1436 = vmul.f32 %v1426, 0.5
  %v1437 = vtanh.pop %v1436
  %v1438 = vadd.f32 %v1437, 1.0
  %v1439 = vmul.f32 %v1438, 0.5
  %v1440 = vmul.f32 %v1434, %v1332
  %v1441 = vmul.f32 %v1430, %v1435
  %v1442 = vadd.f32 %v1440, %v1441
  %v1443 = vtanh.pop %v1442
  %v1444 = vmul.f32 %v1439, %v1443
  %s1445 = scalar_lea.vmem [#allocation4], 64
  %v1446 = vld [vmem:[%s1445] sm:$0xff]
  %v1447 = vld [vmem:[%s1445 + $0x8] sm:$0xff]
  %v1448 = vld [vmem:[%s1445 + $0x10] sm:$0xff]
  %v1449 = vld [vmem:[%s1445 + $0x18] sm:$0xff]
  %v1450 = vpack.c.bf16 %v1444, %v1444
  %1451 = vmatprep.subr.bf16.mxu0 %v1168
  %1452 = vmatpush1.bf16.msra.mxu0 %v1167
  %1453 = vmatprep.subr.bf16.mxu0 %v1172
  %1454 = vmatpush1.bf16.msra.mxu0 %v1171
  %1455 = vmatprep.subr.bf16.mxu0 %v1176
  %1456 = vmatpush1.bf16.msra.mxu0 %v1175
  %1457 = vmatprep.subr.bf16.mxu0 %v1180
  %1458 = vmatpush1.bf16.msra.mxu0 %v1179
  %1459 = vmatprep.subr.bf16.mxu0 %v1184
  %1460 = vmatpush1.bf16.msra.mxu0 %v1183
  %1461 = vmatprep.subr.bf16.mxu0 %v1188
  %1462 = vmatpush1.bf16.msra.mxu0 %v1187
  %1463 = vmatprep.subr.bf16.mxu0 %v1192
  %1464 = vmatpush1.bf16.msra.mxu0 %v1191
  %1465 = vmatprep.subr.bf16.mxu0 %v1196
  %1466 = vmatpush1.bf16.msra.mxu0 %v1195
  %1467 = vmatprep.subr.bf16.mxu0 0
  %1468 = vmatpush1.bf16.msra.mxu0 0
  %1469 = vmatprep.subr.bf16.mxu0 0
  %1470 = vmatpush1.bf16.msra.mxu0 0
  %1471 = vmatprep.subr.bf16.mxu0 0
  %1472 = vmatpush1.bf16.msra.mxu0 0
  %1473 = vmatprep.subr.bf16.mxu0 0
  %1474 = vmatpush1.bf16.msra.mxu0 0
  %1475 = vmatprep.subr.bf16.mxu0 0
  %1476 = vmatpush1.bf16.msra.mxu0 0
  %1477 = vmatprep.subr.bf16.mxu0 0
  %1478 = vmatpush1.bf16.msra.mxu0 0
  %1479 = vmatprep.subr.bf16.mxu0 0
  %1480 = vmatpush1.bf16.msra.mxu0 0
  %1481 = vmatprep.subr.bf16.mxu0 0
  %1482 = vmatpush1.bf16.msra.mxu0 0
  %1483 = vmatprep.mubr.bf16.mxu0 0
  %1484 = vmatmul.mubr.bf16.gmra.mrb[0].mxu0 %v1450
  %v1485 = vpop.f32.mrb[0].mxu0
  %v1486 = vadd.f32 0.0, %v1485
  %v1487 = vpop.f32.mrb[0].mxu0
  %v1488 = vadd.f32 0.0, %v1487
  %v1489 = vpop.f32.mrb[0].mxu0
  %v1490 = vpop.f32.mrb[0].mxu0
  %1491 = vdwg.mxu0
  %1492 = vmatprep.subr.bf16.mxu0 %v1170
  %1493 = vmatpush1.bf16.msra.mxu0 %v1169
  %1494 = vmatprep.subr.bf16.mxu0 %v1174
  %1495 = vmatpush1.bf16.msra.mxu0 %v1173
  %1496 = vmatprep.subr.bf16.mxu0 %v1178
  %1497 = vmatpush1.bf16.msra.mxu0 %v1177
  %1498 = vmatprep.subr.bf16.mxu0 %v1182
  %1499 = vmatpush1.bf16.msra.mxu0 %v1181
  %1500 = vmatprep.subr.bf16.mxu0 %v1186
  %1501 = vmatpush1.bf16.msra.mxu0 %v1185
  %1502 = vmatprep.subr.bf16.mxu0 %v1190
  %1503 = vmatpush1.bf16.msra.mxu0 %v1189
  %1504 = vmatprep.subr.bf16.mxu0 %v1194
  %1505 = vmatpush1.bf16.msra.mxu0 %v1193
  %1506 = vmatprep.subr.bf16.mxu0 %v1198
  %1507 = vmatpush1.bf16.msra.mxu0 %v1197
  %1508 = vmatprep.subr.bf16.mxu0 0
  %1509 = vmatpush1.bf16.msra.mxu0 0
  %1510 = vmatprep.subr.bf16.mxu0 0
  %1511 = vmatpush1.bf16.msra.mxu0 0
  %1512 = vmatprep.subr.bf16.mxu0 0
  %1513 = vmatpush1.bf16.msra.mxu0 0
  %1514 = vmatprep.subr.bf16.mxu0 0
  %1515 = vmatpush1.bf16.msra.mxu0 0
  %1516 = vmatprep.subr.bf16.mxu0 0
  %1517 = vmatpush1.bf16.msra.mxu0 0
  %1518 = vmatprep.subr.bf16.mxu0 0
  %1519 = vmatpush1.bf16.msra.mxu0 0
  %1520 = vmatprep.subr.bf16.mxu0 0
  %1521 = vmatpush1.bf16.msra.mxu0 0
  %1522 = vmatprep.subr.bf16.mxu0 0
  %1523 = vmatpush1.bf16.msra.mxu0 0
  %1524 = vmatprep.mubr.bf16.mxu0 0
  %1525 = vmatmul.mubr.bf16.gmra.mrb[0].mxu0 %v1450
  %v1526 = vpop.f32.mrb[0].mxu0
  %v1527 = vadd.f32 0.0, %v1526
  %v1528 = vpop.f32.mrb[0].mxu0
  %v1529 = vadd.f32 0.0, %v1528
  %v1530 = vpop.f32.mrb[0].mxu0
  %v1531 = vpop.f32.mrb[0].mxu0
  %1532 = vdwg.mxu0
  %v1533 = vadd.f32 %v1446, %v1486
  %v1534 = vadd.f32 %v1447, %v1488
  %v1535 = vadd.f32 %v1448, %v1527
  %v1536 = vadd.f32 %v1449, %v1529
  %v1537 = vmul.f32 %v1533, 0.5
  %v1538 = vtanh.pop %v1537
  %v1539 = vadd.f32 %v1538, 1.0
  %v1540 = vmul.f32 %v1539, 0.5
  %v1541 = vmul.f32 %v1534, 0.5
  %v1542 = vtanh.pop %v1541
  %v1543 = vadd.f32 %v1542, 1.0
  %v1544 = vmul.f32 %v1543, 0.5
  %v1545 = vtanh.pop %v1535
  %v1546 = vmul.f32 %v1536, 0.5
  %v1547 = vtanh.pop %v1546
  %v1548 = vadd.f32 %v1547, 1.0
  %v1549 = vmul.f32 %v1548, 0.5
  %v1550 = vmul.f32 %v1544, %v1442
  %v1551 = vmul.f32 %v1540, %v1545
  %v1552 = vadd.f32 %v1550, %v1551
  %v1553 = vtanh.pop %v1552
  %v1554 = vmul.f32 %v1549, %v1553
  %s1555 = scalar_lea.vmem [#allocation4], 96
  %v1556 = vld [vmem:[%s1555] sm:$0xff]
  %v1557 = vld [vmem:[%s1555 + $0x8] sm:$0xff]
  %v1558 = vld [vmem:[%s1555 + $0x10] sm:$0xff]
  %v1559 = vld [vmem:[%s1555 + $0x18] sm:$0xff]
  %v1560 = vpack.c.bf16 %v1554, %v1554
  %1561 = vmatprep.subr.bf16.mxu0 %v1168
  %1562 = vmatpush1.bf16.msra.mxu0 %v1167
  %1563 = vmatprep.subr.bf16.mxu0 %v1172
  %1564 = vmatpush1.bf16.msra.mxu0 %v1171
  %1565 = vmatprep.subr.bf16.mxu0 %v1176
  %1566 = vmatpush1.bf16.msra.mxu0 %v1175
  %1567 = vmatprep.subr.bf16.mxu0 %v1180
  %1568 = vmatpush1.bf16.msra.mxu0 %v1179
  %1569 = vmatprep.subr.bf16.mxu0 %v1184
  %1570 = vmatpush1.bf16.msra.mxu0 %v1183
  %1571 = vmatprep.subr.bf16.mxu0 %v1188
  %1572 = vmatpush1.bf16.msra.mxu0 %v1187
  %1573 = vmatprep.subr.bf16.mxu0 %v1192
  %1574 = vmatpush1.bf16.msra.mxu0 %v1191
  %1575 = vmatprep.subr.bf16.mxu0 %v1196
  %1576 = vmatpush1.bf16.msra.mxu0 %v1195
  %1577 = vmatprep.subr.bf16.mxu0 0
  %1578 = vmatpush1.bf16.msra.mxu0 0
  %1579 = vmatprep.subr.bf16.mxu0 0
  %1580 = vmatpush1.bf16.msra.mxu0 0
  %1581 = vmatprep.subr.bf16.mxu0 0
  %1582 = vmatpush1.bf16.msra.mxu0 0
  %1583 = vmatprep.subr.bf16.mxu0 0
  %1584 = vmatpush1.bf16.msra.mxu0 0
  %1585 = vmatprep.subr.bf16.mxu0 0
  %1586 = vmatpush1.bf16.msra.mxu0 0
  %1587 = vmatprep.subr.bf16.mxu0 0
  %1588 = vmatpush1.bf16.msra.mxu0 0
  %1589 = vmatprep.subr.bf16.mxu0 0
  %1590 = vmatpush1.bf16.msra.mxu0 0
  %1591 = vmatprep.subr.bf16.mxu0 0
  %1592 = vmatpush1.bf16.msra.mxu0 0
  %1593 = vmatprep.mubr.bf16.mxu0 0
  %1594 = vmatmul.mubr.bf16.gmra.mrb[0].mxu0 %v1560
  %v1595 = vpop.f32.mrb[0].mxu0
  %v1596 = vadd.f32 0.0, %v1595
  %v1597 = vpop.f32.mrb[0].mxu0
  %v1598 = vadd.f32 0.0, %v1597
  %v1599 = vpop.f32.mrb[0].mxu0
  %v1600 = vpop.f32.mrb[0].mxu0
  %1601 = vdwg.mxu0
  %1602 = vmatprep.subr.bf16.mxu0 %v1170
  %1603 = vmatpush1.bf16.msra.mxu0 %v1169
  %1604 = vmatprep.subr.bf16.mxu0 %v1174
  %1605 = vmatpush1.bf16.msra.mxu0 %v1173
  %1606 = vmatprep.subr.bf16.mxu0 %v1178
  %1607 = vmatpush1.bf16.msra.mxu0 %v1177
  %1608 = vmatprep.subr.bf16.mxu0 %v1182
  %1609 = vmatpush1.bf16.msra.mxu0 %v1181
  %1610 = vmatprep.subr.bf16.mxu0 %v1186
  %1611 = vmatpush1.bf16.msra.mxu0 %v1185
  %1612 = vmatprep.subr.bf16.mxu0 %v1190
  %1613 = vmatpush1.bf16.msra.mxu0 %v1189
  %1614 = vmatprep.subr.bf16.mxu0 %v1194
  %1615 = vmatpush1.bf16.msra.mxu0 %v1193
  %1616 = vmatprep.subr.bf16.mxu0 %v1198
  %1617 = vmatpush1.bf16.msra.mxu0 %v1197
  %1618 = vmatprep.subr.bf16.mxu0 0
  %1619 = vmatpush1.bf16.msra.mxu0 0
  %1620 = vmatprep.subr.bf16.mxu0 0
  %1621 = vmatpush1.bf16.msra.mxu0 0
  %1622 = vmatprep.subr.bf16.mxu0 0
  %1623 = vmatpush1.bf16.msra.mxu0 0
  %1624 = vmatprep.subr.bf16.mxu0 0
  %1625 = vmatpush1.bf16.msra.mxu0 0
  %1626 = vmatprep.subr.bf16.mxu0 0
  %1627 = vmatpush1.bf16.msra.mxu0 0
  %1628 = vmatprep.subr.bf16.mxu0 0
  %1629 = vmatpush1.bf16.msra.mxu0 0
  %1630 = vmatprep.subr.bf16.mxu0 0
  %1631 = vmatpush1.bf16.msra.mxu0 0
  %1632 = vmatprep.subr.bf16.mxu0 0
  %1633 = vmatpush1.bf16.msra.mxu0 0
  %1634 = vmatprep.mubr.bf16.mxu0 0
  %1635 = vmatmul.mubr.bf16.gmra.mrb[0].mxu0 %v1560
  %v1636 = vpop.f32.mrb[0].mxu0
  %v1637 = vadd.f32 0.0, %v1636
  %v1638 = vpop.f32.mrb[0].mxu0
  %v1639 = vadd.f32 0.0, %v1638
  %v1640 = vpop.f32.mrb[0].mxu0
  %v1641 = vpop.f32.mrb[0].mxu0
  %1642 = vdwg.mxu0
  %v1643 = vadd.f32 %v1556, %v1596
  %v1644 = vadd.f32 %v1557, %v1598
  %v1645 = vadd.f32 %v1558, %v1637
  %v1646 = vadd.f32 %v1559, %v1639
  %v1647 = vmul.f32 %v1643, 0.5
  %v1648 = vtanh.pop %v1647
  %v1649 = vadd.f32 %v1648, 1.0
  %v1650 = vmul.f32 %v1649, 0.5
  %v1651 = vmul.f32 %v1644, 0.5
  %v1652 = vtanh.pop %v1651
  %v1653 = vadd.f32 %v1652, 1.0
  %v1654 = vmul.f32 %v1653, 0.5
  %v1655 = vtanh.pop %v1645
  %v1656 = vmul.f32 %v1646, 0.5
  %v1657 = vtanh.pop %v1656
  %v1658 = vadd.f32 %v1657, 1.0
  %v1659 = vmul.f32 %v1658, 0.5
  %v1660 = vmul.f32 %v1654, %v1552
  %v1661 = vmul.f32 %v1650, %v1655
  %v1662 = vadd.f32 %v1660, %v1661
  %v1663 = vtanh.pop %v1662
  %v1664 = vmul.f32 %v1659, %v1663
  %s1665 = scalar_lea.vmem [#allocation4], 128
  %v1666 = vld [vmem:[%s1665] sm:$0xff]
  %v1667 = vld [vmem:[%s1665 + $0x8] sm:$0xff]
  %v1668 = vld [vmem:[%s1665 + $0x10] sm:$0xff]
  %v1669 = vld [vmem:[%s1665 + $0x18] sm:$0xff]
  %v1670 = vpack.c.bf16 %v1664, %v1664
  %1671 = vmatprep.subr.bf16.mxu0 %v1168
  %1672 = vmatpush1.bf16.msra.mxu0 %v1167
  %1673 = vmatprep.subr.bf16.mxu0 %v1172
  %1674 = vmatpush1.bf16.msra.mxu0 %v1171
  %1675 = vmatprep.subr.bf16.mxu0 %v1176
  %1676 = vmatpush1.bf16.msra.mxu0 %v1175
  %1677 = vmatprep.subr.bf16.mxu0 %v1180
  %1678 = vmatpush1.bf16.msra.mxu0 %v1179
  %1679 = vmatprep.subr.bf16.mxu0 %v1184
  %1680 = vmatpush1.bf16.msra.mxu0 %v1183
  %1681 = vmatprep.subr.bf16.mxu0 %v1188
  %1682 = vmatpush1.bf16.msra.mxu0 %v1187
  %1683 = vmatprep.subr.bf16.mxu0 %v1192
  %1684 = vmatpush1.bf16.msra.mxu0 %v1191
  %1685 = vmatprep.subr.bf16.mxu0 %v1196
  %1686 = vmatpush1.bf16.msra.mxu0 %v1195
  %1687 = vmatprep.subr.bf16.mxu0 0
  %1688 = vmatpush1.bf16.msra.mxu0 0
  %1689 = vmatprep.subr.bf16.mxu0 0
  %1690 = vmatpush1.bf16.msra.mxu0 0
  %1691 = vmatprep.subr.bf16.mxu0 0
  %1692 = vmatpush1.bf16.msra.mxu0 0
  %1693 = vmatprep.subr.bf16.mxu0 0
  %1694 = vmatpush1.bf16.msra.mxu0 0
  %1695 = vmatprep.subr.bf16.mxu0 0
  %1696 = vmatpush1.bf16.msra.mxu0 0
  %1697 = vmatprep.subr.bf16.mxu0 0
  %1698 = vmatpush1.bf16.msra.mxu0 0
  %1699 = vmatprep.subr.bf16.mxu0 0
  %1700 = vmatpush1.bf16.msra.mxu0 0
  %1701 = vmatprep.subr.bf16.mxu0 0
  %1702 = vmatpush1.bf16.msra.mxu0 0
  %1703 = vmatprep.mubr.bf16.mxu0 0
  %1704 = vmatmul.mubr.bf16.gmra.mrb[0].mxu0 %v1670
  %v1705 = vpop.f32.mrb[0].mxu0
  %v1706 = vadd.f32 0.0, %v1705
  %v1707 = vpop.f32.mrb[0].mxu0
  %v1708 = vadd.f32 0.0, %v1707
  %v1709 = vpop.f32.mrb[0].mxu0
  %v1710 = vpop.f32.mrb[0].mxu0
  %1711 = vdwg.mxu0
  %1712 = vmatprep.subr.bf16.mxu0 %v1170
  %1713 = vmatpush1.bf16.msra.mxu0 %v1169
  %1714 = vmatprep.subr.bf16.mxu0 %v1174
  %1715 = vmatpush1.bf16.msra.mxu0 %v1173
  %1716 = vmatprep.subr.bf16.mxu0 %v1178
  %1717 = vmatpush1.bf16.msra.mxu0 %v1177
  %1718 = vmatprep.subr.bf16.mxu0 %v1182
  %1719 = vmatpush1.bf16.msra.mxu0 %v1181
  %1720 = vmatprep.subr.bf16.mxu0 %v1186
  %1721 = vmatpush1.bf16.msra.mxu0 %v1185
  %1722 = vmatprep.subr.bf16.mxu0 %v1190
  %1723 = vmatpush1.bf16.msra.mxu0 %v1189
  %1724 = vmatprep.subr.bf16.mxu0 %v1194
  %1725 = vmatpush1.bf16.msra.mxu0 %v1193
  %1726 = vmatprep.subr.bf16.mxu0 %v1198
  %1727 = vmatpush1.bf16.msra.mxu0 %v1197
  %1728 = vmatprep.subr.bf16.mxu0 0
  %1729 = vmatpush1.bf16.msra.mxu0 0
  %1730 = vmatprep.subr.bf16.mxu0 0
  %1731 = vmatpush1.bf16.msra.mxu0 0
  %1732 = vmatprep.subr.bf16.mxu0 0
  %1733 = vmatpush1.bf16.msra.mxu0 0
  %1734 = vmatprep.subr.bf16.mxu0 0
  %1735 = vmatpush1.bf16.msra.mxu0 0
  %1736 = vmatprep.subr.bf16.mxu0 0
  %1737 = vmatpush1.bf16.msra.mxu0 0
  %1738 = vmatprep.subr.bf16.mxu0 0
  %1739 = vmatpush1.bf16.msra.mxu0 0
  %1740 = vmatprep.subr.bf16.mxu0 0
  %1741 = vmatpush1.bf16.msra.mxu0 0
  %1742 = vmatprep.subr.bf16.mxu0 0
  %1743 = vmatpush1.bf16.msra.mxu0 0
  %1744 = vmatprep.mubr.bf16.mxu0 0
  %1745 = vmatmul.mubr.bf16.gmra.mrb[0].mxu0 %v1670
  %v1746 = vpop.f32.mrb[0].mxu0
  %v1747 = vadd.f32 0.0, %v1746
  %v1748 = vpop.f32.mrb[0].mxu0
  %v1749 = vadd.f32 0.0, %v1748
  %v1750 = vpop.f32.mrb[0].mxu0
  %v1751 = vpop.f32.mrb[0].mxu0
  %1752 = vdwg.mxu0
  %v1753 = vadd.f32 %v1666, %v1706
  %v1754 = vadd.f32 %v1667, %v1708
  %v1755 = vadd.f32 %v1668, %v1747
  %v1756 = vadd.f32 %v1669, %v1749
  %v1757 = vmul.f32 %v1753, 0.5
  %v1758 = vtanh.pop %v1757
  %v1759 = vadd.f32 %v1758, 1.0
  %v1760 = vmul.f32 %v1759, 0.5
  %v1761 = vmul.f32 %v1754, 0.5
  %v1762 = vtanh.pop %v1761
  %v1763 = vadd.f32 %v1762, 1.0
  %v1764 = vmul.f32 %v1763, 0.5
  %v1765 = vtanh.pop %v1755
  %v1766 = vmul.f32 %v1756, 0.5
  %v1767 = vtanh.pop %v1766
  %v1768 = vadd.f32 %v1767, 1.0
  %v1769 = vmul.f32 %v1768, 0.5
  %v1770 = vmul.f32 %v1764, %v1662
  %v1771 = vmul.f32 %v1760, %v1765
  %v1772 = vadd.f32 %v1770, %v1771
  %v1773 = vtanh.pop %v1772
  %v1774 = vmul.f32 %v1769, %v1773
  %s1775 = scalar_lea.vmem [#allocation4], 160
  %v1776 = vld [vmem:[%s1775] sm:$0xff]
  %v1777 = vld [vmem:[%s1775 + $0x8] sm:$0xff]
  %v1778 = vld [vmem:[%s1775 + $0x10] sm:$0xff]
  %v1779 = vld [vmem:[%s1775 + $0x18] sm:$0xff]
  %v1780 = vpack.c.bf16 %v1774, %v1774
  %1781 = vmatprep.subr.bf16.mxu0 %v1168
  %1782 = vmatpush1.bf16.msra.mxu0 %v1167
  %1783 = vmatprep.subr.bf16.mxu0 %v1172
  %1784 = vmatpush1.bf16.msra.mxu0 %v1171
  %1785 = vmatprep.subr.bf16.mxu0 %v1176
  %1786 = vmatpush1.bf16.msra.mxu0 %v1175
  %1787 = vmatprep.subr.bf16.mxu0 %v1180
  %1788 = vmatpush1.bf16.msra.mxu0 %v1179
  %1789 = vmatprep.subr.bf16.mxu0 %v1184
  %1790 = vmatpush1.bf16.msra.mxu0 %v1183
  %1791 = vmatprep.subr.bf16.mxu0 %v1188
  %1792 = vmatpush1.bf16.msra.mxu0 %v1187
  %1793 = vmatprep.subr.bf16.mxu0 %v1192
  %1794 = vmatpush1.bf16.msra.mxu0 %v1191
  %1795 = vmatprep.subr.bf16.mxu0 %v1196
  %1796 = vmatpush1.bf16.msra.mxu0 %v1195
  %1797 = vmatprep.subr.bf16.mxu0 0
  %1798 = vmatpush1.bf16.msra.mxu0 0
  %1799 = vmatprep.subr.bf16.mxu0 0
  %1800 = vmatpush1.bf16.msra.mxu0 0
  %1801 = vmatprep.subr.bf16.mxu0 0
  %1802 = vmatpush1.bf16.msra.mxu0 0
  %1803 = vmatprep.subr.bf16.mxu0 0
  %1804 = vmatpush1.bf16.msra.mxu0 0
  %1805 = vmatprep.subr.bf16.mxu0 0
  %1806 = vmatpush1.bf16.msra.mxu0 0
  %1807 = vmatprep.subr.bf16.mxu0 0
  %1808 = vmatpush1.bf16.msra.mxu0 0
  %1809 = vmatprep.subr.bf16.mxu0 0
  %1810 = vmatpush1.bf16.msra.mxu0 0
  %1811 = vmatprep.subr.bf16.mxu0 0
  %1812 = vmatpush1.bf16.msra.mxu0 0
  %1813 = vmatprep.mubr.bf16.mxu0 0
  %1814 = vmatmul.mubr.bf16.gmra.mrb[0].mxu0 %v1780
  %v1815 = vpop.f32.mrb[0].mxu0
  %v1816 = vadd.f32 0.0, %v1815
  %v1817 = vpop.f32.mrb[0].mxu0
  %v1818 = vadd.f32 0.0, %v1817
  %v1819 = vpop.f32.mrb[0].mxu0
  %v1820 = vpop.f32.mrb[0].mxu0
  %1821 = vdwg.mxu0
  %1822 = vmatprep.subr.bf16.mxu0 %v1170
  %1823 = vmatpush1.bf16.msra.mxu0 %v1169
  %1824 = vmatprep.subr.bf16.mxu0 %v1174
  %1825 = vmatpush1.bf16.msra.mxu0 %v1173
  %1826 = vmatprep.subr.bf16.mxu0 %v1178
  %1827 = vmatpush1.bf16.msra.mxu0 %v1177
  %1828 = vmatprep.subr.bf16.mxu0 %v1182
  %1829 = vmatpush1.bf16.msra.mxu0 %v1181
  %1830 = vmatprep.subr.bf16.mxu0 %v1186
  %1831 = vmatpush1.bf16.msra.mxu0 %v1185
  %1832 = vmatprep.subr.bf16.mxu0 %v1190
  %1833 = vmatpush1.bf16.msra.mxu0 %v1189
  %1834 = vmatprep.subr.bf16.mxu0 %v1194
  %1835 = vmatpush1.bf16.msra.mxu0 %v1193
  %1836 = vmatprep.subr.bf16.mxu0 %v1198
  %1837 = vmatpush1.bf16.msra.mxu0 %v1197
  %1838 = vmatprep.subr.bf16.mxu0 0
  %1839 = vmatpush1.bf16.msra.mxu0 0
  %1840 = vmatprep.subr.bf16.mxu0 0
  %1841 = vmatpush1.bf16.msra.mxu0 0
  %1842 = vmatprep.subr.bf16.mxu0 0
  %1843 = vmatpush1.bf16.msra.mxu0 0
  %1844 = vmatprep.subr.bf16.mxu0 0
  %1845 = vmatpush1.bf16.msra.mxu0 0
  %1846 = vmatprep.subr.bf16.mxu0 0
  %1847 = vmatpush1.bf16.msra.mxu0 0
  %1848 = vmatprep.subr.bf16.mxu0 0
  %1849 = vmatpush1.bf16.msra.mxu0 0
  %1850 = vmatprep.subr.bf16.mxu0 0
  %1851 = vmatpush1.bf16.msra.mxu0 0
  %1852 = vmatprep.subr.bf16.mxu0 0
  %1853 = vmatpush1.bf16.msra.mxu0 0
  %1854 = vmatprep.mubr.bf16.mxu0 0
  %1855 = vmatmul.mubr.bf16.gmra.mrb[0].mxu0 %v1780
  %v1856 = vpop.f32.mrb[0].mxu0
  %v1857 = vadd.f32 0.0, %v1856
  %v1858 = vpop.f32.mrb[0].mxu0
  %v1859 = vadd.f32 0.0, %v1858
  %v1860 = vpop.f32.mrb[0].mxu0
  %v1861 = vpop.f32.mrb[0].mxu0
  %1862 = vdwg.mxu0
  %v1863 = vadd.f32 %v1776, %v1816
  %v1864 = vadd.f32 %v1777, %v1818
  %v1865 = vadd.f32 %v1778, %v1857
  %v1866 = vadd.f32 %v1779, %v1859
  %v1867 = vmul.f32 %v1863, 0.5
  %v1868 = vtanh.pop %v1867
  %v1869 = vadd.f32 %v1868, 1.0
  %v1870 = vmul.f32 %v1869, 0.5
  %v1871 = vmul.f32 %v1864, 0.5
  %v1872 = vtanh.pop %v1871
  %v1873 = vadd.f32 %v1872, 1.0
  %v1874 = vmul.f32 %v1873, 0.5
  %v1875 = vtanh.pop %v1865
  %v1876 = vmul.f32 %v1866, 0.5
  %v1877 = vtanh.pop %v1876
  %v1878 = vadd.f32 %v1877, 1.0
  %v1879 = vmul.f32 %v1878, 0.5
  %v1880 = vmul.f32 %v1874, %v1772
  %v1881 = vmul.f32 %v1870, %v1875
  %v1882 = vadd.f32 %v1880, %v1881
  %v1883 = vtanh.pop %v1882
  %v1884 = vmul.f32 %v1879, %v1883
  %s1885 = scalar_lea.vmem [#allocation4], 192
  %v1886 = vld [vmem:[%s1885] sm:$0xff]
  %v1887 = vld [vmem:[%s1885 + $0x8] sm:$0xff]
  %v1888 = vld [vmem:[%s1885 + $0x10] sm:$0xff]
  %v1889 = vld [vmem:[%s1885 + $0x18] sm:$0xff]
  %v1890 = vpack.c.bf16 %v1884, %v1884
  %1891 = vmatprep.subr.bf16.mxu0 %v1168
  %1892 = vmatpush1.bf16.msra.mxu0 %v1167
  %1893 = vmatprep.subr.bf16.mxu0 %v1172
  %1894 = vmatpush1.bf16.msra.mxu0 %v1171
  %1895 = vmatprep.subr.bf16.mxu0 %v1176
  %1896 = vmatpush1.bf16.msra.mxu0 %v1175
  %1897 = vmatprep.subr.bf16.mxu0 %v1180
  %1898 = vmatpush1.bf16.msra.mxu0 %v1179
  %1899 = vmatprep.subr.bf16.mxu0 %v1184
  %1900 = vmatpush1.bf16.msra.mxu0 %v1183
  %1901 = vmatprep.subr.bf16.mxu0 %v1188
  %1902 = vmatpush1.bf16.msra.mxu0 %v1187
  %1903 = vmatprep.subr.bf16.mxu0 %v1192
  %1904 = vmatpush1.bf16.msra.mxu0 %v1191
  %1905 = vmatprep.subr.bf16.mxu0 %v1196
  %1906 = vmatpush1.bf16.msra.mxu0 %v1195
  %1907 = vmatprep.subr.bf16.mxu0 0
  %1908 = vmatpush1.bf16.msra.mxu0 0
  %1909 = vmatprep.subr.bf16.mxu0 0
  %1910 = vmatpush1.bf16.msra.mxu0 0
  %1911 = vmatprep.subr.bf16.mxu0 0
  %1912 = vmatpush1.bf16.msra.mxu0 0
  %1913 = vmatprep.subr.bf16.mxu0 0
  %1914 = vmatpush1.bf16.msra.mxu0 0
  %1915 = vmatprep.subr.bf16.mxu0 0
  %1916 = vmatpush1.bf16.msra.mxu0 0
  %1917 = vmatprep.subr.bf16.mxu0 0
  %1918 = vmatpush1.bf16.msra.mxu0 0
  %1919 = vmatprep.subr.bf16.mxu0 0
  %1920 = vmatpush1.bf16.msra.mxu0 0
  %1921 = vmatprep.subr.bf16.mxu0 0
  %1922 = vmatpush1.bf16.msra.mxu0 0
  %1923 = vmatprep.mubr.bf16.mxu0 0
  %1924 = vmatmul.mubr.bf16.gmra.mrb[0].mxu0 %v1890
  %v1925 = vpop.f32.mrb[0].mxu0
  %v1926 = vadd.f32 0.0, %v1925
  %v1927 = vpop.f32.mrb[0].mxu0
  %v1928 = vadd.f32 0.0, %v1927
  %v1929 = vpop.f32.mrb[0].mxu0
  %v1930 = vpop.f32.mrb[0].mxu0
  %1931 = vdwg.mxu0
  %1932 = vmatprep.subr.bf16.mxu0 %v1170
  %1933 = vmatpush1.bf16.msra.mxu0 %v1169
  %1934 = vmatprep.subr.bf16.mxu0 %v1174
  %1935 = vmatpush1.bf16.msra.mxu0 %v1173
  %1936 = vmatprep.subr.bf16.mxu0 %v1178
  %1937 = vmatpush1.bf16.msra.mxu0 %v1177
  %1938 = vmatprep.subr.bf16.mxu0 %v1182
  %1939 = vmatpush1.bf16.msra.mxu0 %v1181
  %1940 = vmatprep.subr.bf16.mxu0 %v1186
  %1941 = vmatpush1.bf16.msra.mxu0 %v1185
  %1942 = vmatprep.subr.bf16.mxu0 %v1190
  %1943 = vmatpush1.bf16.msra.mxu0 %v1189
  %1944 = vmatprep.subr.bf16.mxu0 %v1194
  %1945 = vmatpush1.bf16.msra.mxu0 %v1193
  %1946 = vmatprep.subr.bf16.mxu0 %v1198
  %1947 = vmatpush1.bf16.msra.mxu0 %v1197
  %1948 = vmatprep.subr.bf16.mxu0 0
  %1949 = vmatpush1.bf16.msra.mxu0 0
  %1950 = vmatprep.subr.bf16.mxu0 0
  %1951 = vmatpush1.bf16.msra.mxu0 0
  %1952 = vmatprep.subr.bf16.mxu0 0
  %1953 = vmatpush1.bf16.msra.mxu0 0
  %1954 = vmatprep.subr.bf16.mxu0 0
  %1955 = vmatpush1.bf16.msra.mxu0 0
  %1956 = vmatprep.subr.bf16.mxu0 0
  %1957 = vmatpush1.bf16.msra.mxu0 0
  %1958 = vmatprep.subr.bf16.mxu0 0
  %1959 = vmatpush1.bf16.msra.mxu0 0
  %1960 = vmatprep.subr.bf16.mxu0 0
  %1961 = vmatpush1.bf16.msra.mxu0 0
  %1962 = vmatprep.subr.bf16.mxu0 0
  %1963 = vmatpush1.bf16.msra.mxu0 0
  %1964 = vmatprep.mubr.bf16.mxu0 0
  %1965 = vmatmul.mubr.bf16.gmra.mrb[0].mxu0 %v1890
  %v1966 = vpop.f32.mrb[0].mxu0
  %v1967 = vadd.f32 0.0, %v1966
  %v1968 = vpop.f32.mrb[0].mxu0
  %v1969 = vadd.f32 0.0, %v1968
  %v1970 = vpop.f32.mrb[0].mxu0
  %v1971 = vpop.f32.mrb[0].mxu0
  %1972 = vdwg.mxu0
  %v1973 = vadd.f32 %v1886, %v1926
  %v1974 = vadd.f32 %v1887, %v1928
  %v1975 = vadd.f32 %v1888, %v1967
  %v1976 = vadd.f32 %v1889, %v1969
  %v1977 = vmul.f32 %v1973, 0.5
  %v1978 = vtanh.pop %v1977
  %v1979 = vadd.f32 %v1978, 1.0
  %v1980 = vmul.f32 %v1979, 0.5
  %v1981 = vmul.f32 %v1974, 0.5
  %v1982 = vtanh.pop %v1981
  %v1983 = vadd.f32 %v1982, 1.0
  %v1984 = vmul.f32 %v1983, 0.5
  %v1985 = vtanh.pop %v1975
  %v1986 = vmul.f32 %v1976, 0.5
  %v1987 = vtanh.pop %v1986
  %v1988 = vadd.f32 %v1987, 1.0
  %v1989 = vmul.f32 %v1988, 0.5
  %v1990 = vmul.f32 %v1984, %v1882
  %v1991 = vmul.f32 %v1980, %v1985
  %v1992 = vadd.f32 %v1990, %v1991
  %v1993 = vtanh.pop %v1992
  %v1994 = vmul.f32 %v1989, %v1993
  %s1995 = scalar_lea.vmem [#allocation4], 224
  %v1996 = vld [vmem:[%s1995] sm:$0xff]
  %v1997 = vld [vmem:[%s1995 + $0x8] sm:$0xff]
  %v1998 = vld [vmem:[%s1995 + $0x10] sm:$0xff]
  %v1999 = vld [vmem:[%s1995 + $0x18] sm:$0xff]
  %v2000 = vpack.c.bf16 %v1994, %v1994
  %2001 = vmatprep.subr.bf16.mxu0 %v1168
  %2002 = vmatpush1.bf16.msra.mxu0 %v1167
  %2003 = vmatprep.subr.bf16.mxu0 %v1172
  %2004 = vmatpush1.bf16.msra.mxu0 %v1171
  %2005 = vmatprep.subr.bf16.mxu0 %v1176
  %2006 = vmatpush1.bf16.msra.mxu0 %v1175
  %2007 = vmatprep.subr.bf16.mxu0 %v1180
  %2008 = vmatpush1.bf16.msra.mxu0 %v1179
  %2009 = vmatprep.subr.bf16.mxu0 %v1184
  %2010 = vmatpush1.bf16.msra.mxu0 %v1183
  %2011 = vmatprep.subr.bf16.mxu0 %v1188
  %2012 = vmatpush1.bf16.msra.mxu0 %v1187
  %2013 = vmatprep.subr.bf16.mxu0 %v1192
  %2014 = vmatpush1.bf16.msra.mxu0 %v1191
  %2015 = vmatprep.subr.bf16.mxu0 %v1196
  %2016 = vmatpush1.bf16.msra.mxu0 %v1195
  %2017 = vmatprep.subr.bf16.mxu0 0
  %2018 = vmatpush1.bf16.msra.mxu0 0
  %2019 = vmatprep.subr.bf16.mxu0 0
  %2020 = vmatpush1.bf16.msra.mxu0 0
  %2021 = vmatprep.subr.bf16.mxu0 0
  %2022 = vmatpush1.bf16.msra.mxu0 0
  %2023 = vmatprep.subr.bf16.mxu0 0
  %2024 = vmatpush1.bf16.msra.mxu0 0
  %2025 = vmatprep.subr.bf16.mxu0 0
  %2026 = vmatpush1.bf16.msra.mxu0 0
  %2027 = vmatprep.subr.bf16.mxu0 0
  %2028 = vmatpush1.bf16.msra.mxu0 0
  %2029 = vmatprep.subr.bf16.mxu0 0
  %2030 = vmatpush1.bf16.msra.mxu0 0
  %2031 = vmatprep.subr.bf16.mxu0 0
  %2032 = vmatpush1.bf16.msra.mxu0 0
  %2033 = vmatprep.mubr.bf16.mxu0 0
  %2034 = vmatmul.mubr.bf16.gmra.mrb[0].mxu0 %v2000
  %v2035 = vpop.f32.mrb[0].mxu0
  %v2036 = vadd.f32 0.0, %v2035
  %v2037 = vpop.f32.mrb[0].mxu0
  %v2038 = vadd.f32 0.0, %v2037
  %v2039 = vpop.f32.mrb[0].mxu0
  %v2040 = vpop.f32.mrb[0].mxu0
  %2041 = vdwg.mxu0
  %2042 = vmatprep.subr.bf16.mxu0 %v1170
  %2043 = vmatpush1.bf16.msra.mxu0 %v1169
  %2044 = vmatprep.subr.bf16.mxu0 %v1174
  %2045 = vmatpush1.bf16.msra.mxu0 %v1173
  %2046 = vmatprep.subr.bf16.mxu0 %v1178
  %2047 = vmatpush1.bf16.msra.mxu0 %v1177
  %2048 = vmatprep.subr.bf16.mxu0 %v1182
  %2049 = vmatpush1.bf16.msra.mxu0 %v1181
  %2050 = vmatprep.subr.bf16.mxu0 %v1186
  %2051 = vmatpush1.bf16.msra.mxu0 %v1185
  %2052 = vmatprep.subr.bf16.mxu0 %v1190
  %2053 = vmatpush1.bf16.msra.mxu0 %v1189
  %2054 = vmatprep.subr.bf16.mxu0 %v1194
  %2055 = vmatpush1.bf16.msra.mxu0 %v1193
  %2056 = vmatprep.subr.bf16.mxu0 %v1198
  %2057 = vmatpush1.bf16.msra.mxu0 %v1197
  %2058 = vmatprep.subr.bf16.mxu0 0
  %2059 = vmatpush1.bf16.msra.mxu0 0
  %2060 = vmatprep.subr.bf16.mxu0 0
  %2061 = vmatpush1.bf16.msra.mxu0 0
  %2062 = vmatprep.subr.bf16.mxu0 0
  %2063 = vmatpush1.bf16.msra.mxu0 0
  %2064 = vmatprep.subr.bf16.mxu0 0
  %2065 = vmatpush1.bf16.msra.mxu0 0
  %2066 = vmatprep.subr.bf16.mxu0 0
  %2067 = vmatpush1.bf16.msra.mxu0 0
  %2068 = vmatprep.subr.bf16.mxu0 0
  %2069 = vmatpush1.bf16.msra.mxu0 0
  %2070 = vmatprep.subr.bf16.mxu0 0
  %2071 = vmatpush1.bf16.msra.mxu0 0
  %2072 = vmatprep.subr.bf16.mxu0 0
  %2073 = vmatpush1.bf16.msra.mxu0 0
  %2074 = vmatprep.mubr.bf16.mxu0 0
  %2075 = vmatmul.mubr.bf16.gmra.mrb[0].mxu0 %v2000
  %v2076 = vpop.f32.mrb[0].mxu0
  %v2077 = vadd.f32 0.0, %v2076
  %v2078 = vpop.f32.mrb[0].mxu0
  %v2079 = vadd.f32 0.0, %v2078
  %v2080 = vpop.f32.mrb[0].mxu0
  %v2081 = vpop.f32.mrb[0].mxu0
  %2082 = vdwg.mxu0
  %v2083 = vadd.f32 %v1996, %v2036
  %v2084 = vadd.f32 %v1997, %v2038
  %v2085 = vadd.f32 %v1998, %v2077
  %v2086 = vadd.f32 %v1999, %v2079
  %v2087 = vmul.f32 %v2083, 0.5
  %v2088 = vtanh.pop %v2087
  %v2089 = vadd.f32 %v2088, 1.0
  %v2090 = vmul.f32 %v2089, 0.5
  %v2091 = vmul.f32 %v2084, 0.5
  %v2092 = vtanh.pop %v2091
  %v2093 = vadd.f32 %v2092, 1.0
  %v2094 = vmul.f32 %v2093, 0.5
  %v2095 = vtanh.pop %v2085
  %v2096 = vmul.f32 %v2086, 0.5
  %v2097 = vtanh.pop %v2096
  %v2098 = vadd.f32 %v2097, 1.0
  %v2099 = vmul.f32 %v2098, 0.5
  %v2100 = vmul.f32 %v2094, %v1992
  %v2101 = vmul.f32 %v2090, %v2095
  %v2102 = vadd.f32 %v2100, %v2101
  %v2103 = vtanh.pop %v2102
  %v2104 = vmul.f32 %v2099, %v2103
  %2105 = vst [vmem:[#allocation2] sm:$0xff] %v2104
  %2106 = vst [vmem:[#allocation3] sm:$0xff] %v2102
  // Predicated region
  $region30: #{topic_model_forward.1} parent=0 // pred_check
    %p2107 = pneg %p24
  $region31: #{topic_model_forward.1} parent=0 // pred_check_branch
    %2109 = sbr.rel (%p2107) target = $region33
  $region32: #{topic_model_forward.1} parent=0 // pred_region
    %v2110 = vpack.c.bf16 %v2104, %v2104
    %v2111 = vld [vmem:[%s4] sm:$0xf]
    %v2112 = vld [vmem:[%s4 + $0x4] sm:$0xf]
    %v2113 = vld [vmem:[%s4 + $0x8] sm:$0xf]
    %v2114 = vld [vmem:[%s4 + $0xc] sm:$0xf]
    %v2115 = vld [vmem:[%s4 + $0x10] sm:$0xf]
    %v2116 = vld [vmem:[%s4 + $0x14] sm:$0xf]
    %v2117 = vld [vmem:[%s4 + $0x18] sm:$0xf]
    %v2118 = vld [vmem:[%s4 + $0x1c] sm:$0xf]
    %v2119 = vld [vmem:[%s4 + $0x20] sm:$0xf]
    %v2120 = vld [vmem:[%s4 + $0x24] sm:$0xf]
    %v2121 = vld [vmem:[%s4 + $0x28] sm:$0xf]
    %v2122 = vld [vmem:[%s4 + $0x2c] sm:$0xf]
    %v2123 = vld [vmem:[%s4 + $0x30] sm:$0xf]
    %v2124 = vld [vmem:[%s4 + $0x34] sm:$0xf]
    %v2125 = vld [vmem:[%s4 + $0x38] sm:$0xf]
    %v2126 = vld [vmem:[%s4 + $0x3c] sm:$0xf]
    %v2127 = vld [vmem:[%s5] sm:$0x1]
    %v2129 = vlaneseq
    %v2130 = vshrl.u32 %v2129, 7
    %v2131 = vsub.s32 0, %v2130
    %v2132 = vrot.slane %v2127, %v2131
    %v2150 = vunpack.c.l.b16 %v2111
    %v2151 = vunpack.c.l.b16 %v2112
    %v2152 = vunpack.c.l.b16 %v2113
    %v2153 = vunpack.c.l.b16 %v2114
    %v2154 = vunpack.c.l.b16 %v2115
    %v2155 = vunpack.c.l.b16 %v2116
    %v2156 = vunpack.c.l.b16 %v2117
    %v2157 = vunpack.c.l.b16 %v2118
    %v2158 = vunpack.c.l.b16 %v2119
    %v2159 = vunpack.c.l.b16 %v2120
    %v2160 = vunpack.c.l.b16 %v2121
    %v2161 = vunpack.c.l.b16 %v2122
    %v2162 = vunpack.c.l.b16 %v2123
    %v2163 = vunpack.c.l.b16 %v2124
    %v2164 = vunpack.c.l.b16 %v2125
    %v2165 = vunpack.c.l.b16 %v2126
    %v2166 = vpack.c.b16 %v2151, %v2150
    %v2167 = vpack.c.b16 %v2153, %v2152
    %v2168 = vpack.c.b16 %v2155, %v2154
    %v2169 = vpack.c.b16 %v2157, %v2156
    %v2170 = vpack.c.b16 %v2159, %v2158
    %v2171 = vpack.c.b16 %v2161, %v2160
    %v2172 = vpack.c.b16 %v2163, %v2162
    %v2173 = vpack.c.b16 %v2165, %v2164
    %2182 = vmatprep.subr.bf16.mxu0 0
    %2183 = vmatpush1.bf16.msra.mxu0 %v2166
    %2184 = vmatprep.subr.bf16.mxu0 0
    %2185 = vmatpush1.bf16.msra.mxu0 %v2167
    %2186 = vmatprep.subr.bf16.mxu0 0
    %2187 = vmatpush1.bf16.msra.mxu0 %v2168
    %2188 = vmatprep.subr.bf16.mxu0 0
    %2189 = vmatpush1.bf16.msra.mxu0 %v2169
    %2190 = vmatprep.subr.bf16.mxu0 0
    %2191 = vmatpush1.bf16.msra.mxu0 %v2170
    %2192 = vmatprep.subr.bf16.mxu0 0
    %2193 = vmatpush1.bf16.msra.mxu0 %v2171
    %2194 = vmatprep.subr.bf16.mxu0 0
    %2195 = vmatpush1.bf16.msra.mxu0 %v2172
    %2196 = vmatprep.subr.bf16.mxu0 0
    %2197 = vmatpush1.bf16.msra.mxu0 %v2173
    %2198 = vmatprep.subr.bf16.mxu0 0
    %2199 = vmatpush1.bf16.msra.mxu0 0
    %2200 = vmatprep.subr.bf16.mxu0 0
    %2201 = vmatpush1.bf16.msra.mxu0 0
    %2202 = vmatprep.subr.bf16.mxu0 0
    %2203 = vmatpush1.bf16.msra.mxu0 0
    %2204 = vmatprep.subr.bf16.mxu0 0
    %2205 = vmatpush1.bf16.msra.mxu0 0
    %2206 = vmatprep.subr.bf16.mxu0 0
    %2207 = vmatpush1.bf16.msra.mxu0 0
    %2208 = vmatprep.subr.bf16.mxu0 0
    %2209 = vmatpush1.bf16.msra.mxu0 0
    %2210 = vmatprep.subr.bf16.mxu0 0
    %2211 = vmatpush1.bf16.msra.mxu0 0
    %2212 = vmatprep.subr.bf16.mxu0 0
    %2213 = vmatpush1.bf16.msra.mxu0 0
    %2214 = vmatprep.mubr.bf16.mxu0 0
    %2215 = vmatmul.mubr.bf16.gmra.mrb[0].mxu0 %v2110
    %v2216 = vpop.f32.mrb[0].mxu0
    %v2217 = vadd.f32 %v2132, %v2216
    %v2218 = vpop.f32.mrb[0].mxu0
    %v2219 = vpop.f32.mrb[0].mxu0
    %v2220 = vpop.f32.mrb[0].mxu0
    %2221 = vdwg.mxu0
    %2222 = vmax.xlane.f32.xlu0 %v2217
    %v2223 = vpop.xlane.xlu0 %2222
    %v2224 = vsub.f32 %v2217, %v2223
    %v2225 = vmul.f32 %v2224, 1.442695
    %v2226 = vpow.pop %v2225
    %2227 = vadd.xlane.f32.xlu0 %v2226
    %v2228 = vpop.xlane.xlu0 %2227
    %v2229 = vlog2.pop %v2228
    %v2230 = vmul.f32 %v2229, 0.6931472
    %v2231 = vsub.f32 %v2224, %v2230
    %2232 = vst [vmem:[%s6] sm:$0xff] %v2231
  $region33: #{topic_model_forward.1} parent=0 // pred_fallthru
    _
  // Predicated region
  $region34: #{topic_model_forward.1} parent=0 // pred_check
    _
  $region35: #{topic_model_forward.1} parent=0 // pred_check_branch
    %2234 = sbr.rel (0) target = $region37
  $region36: #{topic_model_forward.1} parent=0 // pred_region
    _
  $region37: #{topic_model_forward.1} parent=0 // pred_fallthru
    _
  // Predicated region
  $region38: #{topic_model_forward.1} parent=0 // pred_check
    _
  $region39: #{topic_model_forward.1} parent=0 // pred_check_branch
    %2236 = sbr.rel (0) target = $region41
  $region40: #{topic_model_forward.1} parent=0 // pred_region
    _
  $region41: #{topic_model_forward.1} parent=0 // pred_fallthru
    _

</llo_original>
